<compile_context>
chip_gen: v6e
topology: v6e:2x2x1
jax: 0.10.0
libtpu: 0.0.40
codegen_flags: <defaults>
</compile_context>

<pallas_src>
import functools

import jax
import jax.numpy as jnp
from jax.experimental import pallas as pl
from jax.experimental.pallas import tpu as pltpu


def _round_up(n, m):
    return ((n + m - 1) // m) * m


def _mlp_fused_kernel(x_ref, *refs, n_layers, out_dims, final_act):
    """refs = (w0, ..., w_{L-1}, b_all, o). Computes the full MLP in VMEM."""
    w_refs = refs[:n_layers]
    b_ref = refs[n_layers]          # (n_layers, Np_max) f32, VMEM-resident
    o_ref = refs[n_layers + 1]

    h = x_ref[...]                  # (TB, Kp0) bf16 (already cast in wrapper)
    for i in range(n_layers):       # static unroll (layer count is config-static)
        w = w_refs[i][...]          # (Kp_i, Np_i) bf16
        npad = out_dims[i]
        b = b_ref[i:i + 1, :npad]   # (1, Np_i) f32, static slice
        y = jnp.dot(h, w, preferred_element_type=jnp.float32) + b
        if i < n_layers - 1:
            h = jnp.maximum(y, 0.0).astype(jnp.bfloat16)   # ReLU (+Dropout=id)
        else:
            if final_act == "sigmoid":
                out = jax.nn.sigmoid(y)
            else:
                # Softmax over dim 1 (2-D input). Padded lanes carry bias
                # -1e30 and zero weight columns -> exp underflows to exactly
                # 0, so the softmax over real lanes is unchanged.
                out = jax.nn.softmax(y, axis=-1)
            o_ref[...] = out.astype(o_ref.dtype)


def _pallas_mlp(x_pad, weights, b_all, out_dims, final_act, tb):
    """x_pad: (Bpad, Kp) bf16; weights: tuple of bf16 (Kp_i, Np_i); b_all f32."""
    Bpad, Kp = x_pad.shape
    n_layers = len(weights)
    n_out_pad = out_dims[-1]
    grid = (Bpad // tb,)

    # x / out are batch-tiled; weights and packed biases stay resident
    # (constant block index -> no re-DMA across grid steps).
    in_specs = [pl.BlockSpec((tb, Kp), lambda i: (i, 0))]
    for w in weights:
        in_specs.append(pl.BlockSpec(w.shape, lambda i: (0, 0)))
    in_specs.append(pl.BlockSpec(b_all.shape, lambda i: (0, 0)))
    out_specs = pl.BlockSpec((tb, n_out_pad), lambda i: (i, 0))

    kernel = functools.partial(
        _mlp_fused_kernel,
        n_layers=n_layers,
        out_dims=out_dims,
        final_act=final_act,
    )

    # Explicit VMEM budget: double-buffered x/out tiles + resident params.
    param_bytes = sum(int(p.size) * p.dtype.itemsize for p in (*weights, b_all))
    x_tile_bytes = tb * Kp * 2                 # bf16
    out_tile_bytes = tb * n_out_pad * 4        # f32
    vmem_limit = 2 * (x_tile_bytes + out_tile_bytes) + 2 * param_bytes + (4 << 20)
    vmem_limit = min(max(vmem_limit, 32 << 20), 64 << 20)

    return pl.pallas_call(
        kernel,
        out_shape=jax.ShapeDtypeStruct((Bpad, n_out_pad), jnp.float32),
        grid_spec=pltpu.PrefetchScalarGridSpec(
            num_scalar_prefetch=0,
            grid=grid,
            in_specs=in_specs,
            out_specs=out_specs,
        ),
        compiler_params=pltpu.CompilerParams(
            dimension_semantics=("parallel",),   # v7x: shard batch tiles on 2 TCs
            vmem_limit_bytes=vmem_limit,
        ),
    )(x_pad, *weights, b_all)


@functools.partial(jax.jit, static_argnames=("final_act", "n_out", "block_b"))
def _mlp_forward(x, weights, b_all, final_act, n_out, block_b=None):
    B, _ = x.shape
    out_dims = tuple(int(w.shape[1]) for w in weights)

    if block_b is None:
        # Single grid step for small batches; 256-row tiles once B is large
        # (throughput lever: amortize the ~1.1 MiB weight DMA + dispatch).
        tb = 256 if B > 256 else max(8, _round_up(B, 8))
    else:
        tb = block_b
    Bpad = _round_up(max(B, tb), tb)

    # Cast to bf16 here (fused with pad): halves x HBM->VMEM traffic; the
    # kernel already runs the matmuls in bf16 so numerics are unchanged.
    x_pad = x.astype(jnp.bfloat16)
    if Bpad != B:
        x_pad = jnp.pad(x_pad, ((0, Bpad - B), (0, 0)))

    out_pad = _pallas_mlp(x_pad, weights, b_all, out_dims, final_act, tb)
    return out_pad[:B, :n_out]


class BaseModelPallas:
    """Pallas re-implementation of BaseModel.forward (inference)."""

    INPUT_DIM = 4096

    def __init__(self, config_dict, key):
        self.config_dict = config_dict
        n_out = len(config_dict["output_options"])
        dims = (
            [self.INPUT_DIM]
            + [config_dict["n_neurons"]] * config_dict["hidden_layers"]
            + [n_out]
        )
        # Padded (lane-aligned) dims: multiples of 128 on every feature axis.
        dims_pad = [_round_up(d, 128) for d in dims]
        n_layers = len(dims) - 1
        np_max = max(dims_pad[1:])

        weights = []
        b_rows = []
        for i in range(n_layers):
            fan_in, fan_out = dims[i], dims[i + 1]
            pin, pout = dims_pad[i], dims_pad[i + 1]
            key, kw, kb = jax.random.split(key, 3)
            bound = 1.0 / (fan_in ** 0.5)  # matches nn.Linear default init
            w = jax.random.uniform(
                kw, (fan_in, fan_out), jnp.float32, -bound, bound
            )
            b = jax.random.uniform(kb, (fan_out,), jnp.float32, -bound, bound)

            # Zero-pad weights (padded rows/cols contribute nothing).
            w_pad = jnp.zeros((pin, pout), jnp.float32)
            w_pad = w_pad.at[:fan_in, :fan_out].set(w)
            weights.append(w_pad.astype(jnp.bfloat16))  # bf16 weights (MXU-native)

            # Hidden-layer bias pad = 0 (ReLU(0)=0 -> exact); final-layer bias
            # pad = -1e30 (kills padded lanes in softmax/sigmoid).
            pad_val = 0.0 if i < n_layers - 1 else -1e30
            b_row = jnp.full((np_max,), pad_val, jnp.float32)
            b_row = b_row.at[:fan_out].set(b)
            b_rows.append(b_row)

        self.weights = tuple(weights)
        self.b_all = jnp.stack(b_rows, axis=0)          # (n_layers, Np_max) f32

        self.n_out = n_out
        self.final_act = (
            "sigmoid" if config_dict["output_type"] == "ordinal" else "softmax"
        )

    def forward(self, x, block_b=None):
        return _mlp_forward(
            x, self.weights, self.b_all, self.final_act, self.n_out, block_b
        )

    __call__ = forward


if __name__ == "__main__":
    config_dict = {
        "n_neurons": 128,
        "hidden_layers": 2,
        "output_options": ["A", "B", "C", "D", "E"],  # 5 ordinal bins
        "output_type": "ordinal",
        "dropout": 0.1,
        "learning_rate": 1e-3,
        "weight_decay": 0.0,
        "uncertainty_method": "none",
        "method_dict": {},
    }

    key = jax.random.PRNGKey(0)
    key, k_model, k_x = jax.random.split(key, 3)

    # --- sigmoid (ordinal) head, single-step grid ---
    model = BaseModelPallas(config_dict, k_model)
    batch = 8
    x = jax.random.uniform(k_x, (batch, BaseModelPallas.INPUT_DIM), jnp.float32)
    out = jax.block_until_ready(model(x))
    assert out.shape == (batch, len(config_dict["output_options"]))
    assert bool(jnp.all(jnp.isfinite(out)))
    assert bool(jnp.all((out >= 0.0) & (out <= 1.0)))  # sigmoid output range

    # --- softmax (classes) head, multi-step batch-tiled grid (grid = 2) ---
    config_sm = dict(config_dict, output_type="classes")
    key, k_model2, k_x2 = jax.random.split(key, 3)
    model_sm = BaseModelPallas(config_sm, k_model2)
    x2 = jax.random.uniform(k_x2, (32, BaseModelPallas.INPUT_DIM), jnp.float32)
    out2 = jax.block_until_ready(model_sm(x2, block_b=16))
    assert out2.shape == (32, len(config_dict["output_options"]))
    assert bool(jnp.all(jnp.isfinite(out2)))
    row_sums = jnp.sum(out2, axis=-1)
    assert bool(jnp.all(jnp.abs(row_sums - 1.0) < 1e-3))  # softmax rows sum to 1

    print("KERNEL_OK")
</pallas_src>

<mosaic_0001>
module attributes {stable_mosaic.version = 11 : i64} {
  func.func @_mlp_fused_kernel(%arg0: i32, %arg1: memref<8x4096xbf16, #tpu.memory_space<vmem>>, %arg2: memref<4096x128xbf16, #tpu.memory_space<vmem>>, %arg3: memref<128x128xbf16, #tpu.memory_space<vmem>>, %arg4: memref<128x128xbf16, #tpu.memory_space<vmem>>, %arg5: memref<3x128xf32, #tpu.memory_space<vmem>>, %arg6: memref<8x128xf32, #tpu.memory_space<vmem>>) attributes {dimension_semantics = [#tpu.dimension_semantics<parallel>], iteration_bounds = array<i64: 1>, scalar_prefetch = 0 : i64, scratch_operands = 0 : i64, tpu.core_type = #tpu.core_type<tc>, window_params = [{transform_indices = @transform_0, window_bounds = array<i64: 8, 4096>}, {pipeline_mode = #tpu.pipeline_mode<synchronous>, transform_indices = @transform_1, window_bounds = array<i64: 4096, 128>}, {pipeline_mode = #tpu.pipeline_mode<synchronous>, transform_indices = @transform_2, window_bounds = array<i64: 128, 128>}, {pipeline_mode = #tpu.pipeline_mode<synchronous>, transform_indices = @transform_3, window_bounds = array<i64: 128, 128>}, {pipeline_mode = #tpu.pipeline_mode<synchronous>, transform_indices = @transform_4, window_bounds = array<i64: 3, 128>}, {transform_indices = @transform_5, window_bounds = array<i64: 8, 128>}]} {
    %c0 = arith.constant 0 : index
    %c0_0 = arith.constant 0 : index
    %0 = vector.load %arg1[%c0, %c0_0] : memref<8x4096xbf16, #tpu.memory_space<vmem>>, vector<8x4096xbf16>
    %c0_1 = arith.constant 0 : index
    %c0_2 = arith.constant 0 : index
    %1 = vector.load %arg2[%c0_1, %c0_2] : memref<4096x128xbf16, #tpu.memory_space<vmem>>, vector<4096x128xbf16>
    %c0_3 = arith.constant 0 : index
    %c0_4 = arith.constant 0 : index
    %2 = vector.load %arg5[%c0_3, %c0_4] : memref<3x128xf32, #tpu.memory_space<vmem>>, vector<1x128xf32>
    %cst = arith.constant dense<0.000000e+00> : vector<8x128xf32>
    %3 = tpu.matmul %0, %1, %cst {dimension_numbers = #tpu.dot_dimension_numbers<[1], [0], [0], [1], [0, 0, 1, 1], [], []>} : vector<8x4096xbf16>, vector<4096x128xbf16>, vector<8x128xf32> -> vector<8x128xf32>
    %4 = vector.broadcast %2 : vector<1x128xf32> to vector<8x128xf32>
    %5 = arith.addf %3, %4 : vector<8x128xf32>
    %cst_5 = arith.constant 0.000000e+00 : f32
    %6 = vector.broadcast %cst_5 : f32 to vector<8x128xf32>
    %7 = arith.maximumf %5, %6 : vector<8x128xf32>
    %8 = arith.truncf %7 : vector<8x128xf32> to vector<8x128xbf16>
    %c0_6 = arith.constant 0 : index
    %c0_7 = arith.constant 0 : index
    %9 = vector.load %arg3[%c0_6, %c0_7] : memref<128x128xbf16, #tpu.memory_space<vmem>>, vector<128x128xbf16>
    %c1 = arith.constant 1 : index
    %c0_8 = arith.constant 0 : index
    %10 = vector.load %arg5[%c1, %c0_8] : memref<3x128xf32, #tpu.memory_space<vmem>>, vector<1x128xf32>
    %cst_9 = arith.constant dense<0.000000e+00> : vector<8x128xf32>
    %11 = tpu.matmul %8, %9, %cst_9 {dimension_numbers = #tpu.dot_dimension_numbers<[1], [0], [0], [1], [0, 0, 1, 1], [], []>} : vector<8x128xbf16>, vector<128x128xbf16>, vector<8x128xf32> -> vector<8x128xf32>
    %12 = vector.broadcast %10 : vector<1x128xf32> to vector<8x128xf32>
    %13 = arith.addf %11, %12 : vector<8x128xf32>
    %cst_10 = arith.constant 0.000000e+00 : f32
    %14 = vector.broadcast %cst_10 : f32 to vector<8x128xf32>
    %15 = arith.maximumf %13, %14 : vector<8x128xf32>
    %16 = arith.truncf %15 : vector<8x128xf32> to vector<8x128xbf16>
    %c0_11 = arith.constant 0 : index
    %c0_12 = arith.constant 0 : index
    %17 = vector.load %arg4[%c0_11, %c0_12] : memref<128x128xbf16, #tpu.memory_space<vmem>>, vector<128x128xbf16>
    %c2 = arith.constant 2 : index
    %c0_13 = arith.constant 0 : index
    %18 = vector.load %arg5[%c2, %c0_13] : memref<3x128xf32, #tpu.memory_space<vmem>>, vector<1x128xf32>
    %cst_14 = arith.constant dense<0.000000e+00> : vector<8x128xf32>
    %19 = tpu.matmul %16, %17, %cst_14 {dimension_numbers = #tpu.dot_dimension_numbers<[1], [0], [0], [1], [0, 0, 1, 1], [], []>} : vector<8x128xbf16>, vector<128x128xbf16>, vector<8x128xf32> -> vector<8x128xf32>
    %20 = vector.broadcast %18 : vector<1x128xf32> to vector<8x128xf32>
    %21 = arith.addf %19, %20 : vector<8x128xf32>
    %22 = arith.negf %21 : vector<8x128xf32>
    %23 = math.exp %22 : vector<8x128xf32>
    %cst_15 = arith.constant 1.000000e+00 : f32
    %24 = vector.broadcast %cst_15 : f32 to vector<8x128xf32>
    %25 = arith.addf %24, %23 : vector<8x128xf32>
    %26 = arith.divf %24, %25 : vector<8x128xf32>
    %c0_16 = arith.constant 0 : index
    %c0_17 = arith.constant 0 : index
    %27 = vector.load %arg6[%c0_16, %c0_17] : memref<8x128xf32, #tpu.memory_space<vmem>>, vector<8x128xf32>
    tpu.vector_store %arg6[%c0_16, %c0_17], %26 {strides = array<i32>} : memref<8x128xf32, #tpu.memory_space<vmem>>, vector<8x128xf32>,
    return
  }
  func.func @transform_0(%arg0: i32) -> (i32, i32) {
    %c0_i32 = arith.constant 0 : i32
    %c0_i32_0 = arith.constant 0 : i32
    return %arg0, %c0_i32 : i32, i32
  }
  func.func @transform_1(%arg0: i32) -> (i32, i32) {
    %c0_i32 = arith.constant 0 : i32
    %c0_i32_0 = arith.constant 0 : i32
    %c0_i32_1 = arith.constant 0 : i32
    return %c0_i32, %c0_i32_0 : i32, i32
  }
  func.func @transform_2(%arg0: i32) -> (i32, i32) {
    %c0_i32 = arith.constant 0 : i32
    %c0_i32_0 = arith.constant 0 : i32
    %c0_i32_1 = arith.constant 0 : i32
    return %c0_i32, %c0_i32_0 : i32, i32
  }
  func.func @transform_3(%arg0: i32) -> (i32, i32) {
    %c0_i32 = arith.constant 0 : i32
    %c0_i32_0 = arith.constant 0 : i32
    %c0_i32_1 = arith.constant 0 : i32
    return %c0_i32, %c0_i32_0 : i32, i32
  }
  func.func @transform_4(%arg0: i32) -> (i32, i32) {
    %c0_i32 = arith.constant 0 : i32
    %c0_i32_0 = arith.constant 0 : i32
    %c0_i32_1 = arith.constant 0 : i32
    return %c0_i32, %c0_i32_0 : i32, i32
  }
  func.func @transform_5(%arg0: i32) -> (i32, i32) {
    %c0_i32 = arith.constant 0 : i32
    %c0_i32_0 = arith.constant 0 : i32
    return %arg0, %c0_i32 : i32, i32
  }
}

</mosaic_0001>

<llo_original>
// kernel: _mlp_forward.1
$region0: #{_mlp_forward.1}
  #allocation0 [shape = 'u32[]', space=smem, size = 0x4, offset = 0x4, fixed_abs, tag = 'smem constant byte address 0x4 - core index']
  #allocation1 [shape = 'u32[144,128]{1,0:T(1,128)}', space=vmem, size = 0x12000, scoped, tag = 'internal scratch']
  %s0 = inlined_call_operand.vmem [shape: bf16[8,4096], index: 0, kind: input, shape index: {}]
  %s1 = inlined_call_operand.hbm [shape: bf16[4096,128], index: 1, kind: input, shape index: {}]
  %s2 = inlined_call_operand.vmem [shape: bf16[128,128], index: 2, kind: input, shape index: {}]
  %s3 = inlined_call_operand.vmem [shape: bf16[128,128], index: 3, kind: input, shape index: {}]
  %s4 = inlined_call_operand.vmem [shape: f32[3,128], index: 4, kind: input, shape index: {}]
  %s5 = inlined_call_operand.hbm [shape: f32[8,128], index: 5, kind: output, shape index: {}]
  %s6 = sld [smem:[#allocation0]]
  $region34: #{_mlp_forward.1} parent=0
    _
  %s8 = ssub.s32 1, %s6
  %s9 = scalar_select 0, %s8, %s6
  $region1: #{_mlp_forward.1} parent=0
    #allocation2 [shape = 'u8[1048576]{0}', space=vmem, size = 0x100000, scoped, tag = 'input window, operand 1, single buffered']
    #allocation3 [shape = 's32[1]{0}', space=sflag, size = 0x4, scoped, tag = 'scoped memory for _mlp_forward.1']
    #allocation4 [shape = 's32[1]{0}', space=sflag, size = 0x4, scoped, tag = 'scoped memory for _mlp_forward.1']
    #allocation5 [shape = 'u8[4096]{0}', space=vmem, size = 0x1000, scoped, tag = 'output window, operand 0, single buffered']
    %10 = vsyncpa [#allocation3], 0
    %11 = vsyncpa [#allocation4], 0
    // Predicated region
    $region2: #{_mlp_forward.1} parent=1 // pred_check
      _
    $region3: #{_mlp_forward.1} parent=1 // pred_check_branch
      %13 = sbr.rel (0) target = $region5
    $region4: #{_mlp_forward.1} parent=1 // pred_region
      _
    $region5: #{_mlp_forward.1} parent=1 // pred_fallthru
      _
    // Predicated region
    $region6: #{_mlp_forward.1} parent=1 // pred_check
      _
    $region7: #{_mlp_forward.1} parent=1 // pred_check_branch
      %15 = sbr.rel (0) target = $region9
    $region8: #{_mlp_forward.1} parent=1 // pred_region
      %s17 = ssub.s32 32768, 32768
      %18 = vsyncadd [#allocation3], %s17
      %s19 = sshll.u32 [#allocation2], 4
      %s20 = int_to_ptr.vmem [resolvable:$true] %s19
      %25 = dma.hbm_to_vmem [thread:$0]  %s1, 32768, %s20, [#allocation3], 64, 64, 4
    $region9: #{_mlp_forward.1} parent=1 // pred_fallthru
      _
    // Predicated region
    $region10: #{_mlp_forward.1} parent=1 // pred_check
      _
    $region11: #{_mlp_forward.1} parent=1 // pred_check_branch
      %27 = sbr.rel (0) target = $region13
    $region12: #{_mlp_forward.1} parent=1 // pred_region
      _
    $region13: #{_mlp_forward.1} parent=1 // pred_fallthru
      _
    // Predicated region
    $region14: #{_mlp_forward.1} parent=1 // pred_check
      _
    $region15: #{_mlp_forward.1} parent=1 // pred_check_branch
      %29 = sbr.rel (0) target = $region17
    $region16: #{_mlp_forward.1} parent=1 // pred_region
      _
    $region17: #{_mlp_forward.1} parent=1 // pred_fallthru
      _
    // Predicated region
    $region18: #{_mlp_forward.1} parent=1 // pred_check
      _
    $region19: #{_mlp_forward.1} parent=1 // pred_check_branch
      %31 = sbr.rel (0) target = $region21
    $region20: #{_mlp_forward.1} parent=1 // pred_region
      _
    $region21: #{_mlp_forward.1} parent=1 // pred_fallthru
      _
    // Predicated region
    $region22: #{_mlp_forward.1} parent=1 // pred_check
      _
    $region23: #{_mlp_forward.1} parent=1 // pred_check_branch
      %33 = sbr.rel (0) target = $region25
    $region24: #{_mlp_forward.1} parent=1 // pred_region
      %34 = dma.done [#allocation3], 32768
    $region25: #{_mlp_forward.1} parent=1 // pred_fallthru
      _
    %v36 = vld [vmem:[%s0] sm:$0xff]
    %v37 = vld [vmem:[%s0 + $0x8] sm:$0xff]
    %v38 = vld [vmem:[%s0 + $0x10] sm:$0xff]
    %v39 = vld [vmem:[%s0 + $0x18] sm:$0xff]
    %v40 = vld [vmem:[%s0 + $0x20] sm:$0xff]
    %v41 = vld [vmem:[%s0 + $0x28] sm:$0xff]
    %v42 = vld [vmem:[%s0 + $0x30] sm:$0xff]
    %v43 = vld [vmem:[%s0 + $0x38] sm:$0xff]
    %v44 = vld [vmem:[%s0 + $0x40] sm:$0xff]
    %v45 = vld [vmem:[%s0 + $0x48] sm:$0xff]
    %v46 = vld [vmem:[%s0 + $0x50] sm:$0xff]
    %v47 = vld [vmem:[%s0 + $0x58] sm:$0xff]
    %v48 = vld [vmem:[%s0 + $0x60] sm:$0xff]
    %v49 = vld [vmem:[%s0 + $0x68] sm:$0xff]
    %v50 = vld [vmem:[%s0 + $0x70] sm:$0xff]
    %v51 = vld [vmem:[%s0 + $0x78] sm:$0xff]
    %v52 = vld [vmem:[#allocation2] sm:$0xf]
    %v53 = vld [vmem:[#allocation2 + $0x4] sm:$0xf]
    %v54 = vld [vmem:[#allocation2 + $0x8] sm:$0xf]
    %v55 = vld [vmem:[#allocation2 + $0xc] sm:$0xf]
    %v56 = vld [vmem:[#allocation2 + $0x10] sm:$0xf]
    %v57 = vld [vmem:[#allocation2 + $0x14] sm:$0xf]
    %v58 = vld [vmem:[#allocation2 + $0x18] sm:$0xf]
    %v59 = vld [vmem:[#allocation2 + $0x1c] sm:$0xf]
    %v60 = vld [vmem:[#allocation2 + $0x20] sm:$0xf]
    %v61 = vld [vmem:[#allocation2 + $0x24] sm:$0xf]
    %v62 = vld [vmem:[#allocation2 + $0x28] sm:$0xf]
    %v63 = vld [vmem:[#allocation2 + $0x2c] sm:$0xf]
    %v64 = vld [vmem:[#allocation2 + $0x30] sm:$0xf]
    %v65 = vld [vmem:[#allocation2 + $0x34] sm:$0xf]
    %v66 = vld [vmem:[#allocation2 + $0x38] sm:$0xf]
    %v67 = vld [vmem:[#allocation2 + $0x3c] sm:$0xf]
    %v68 = vld [vmem:[#allocation2 + $0x40] sm:$0xf]
    %v69 = vld [vmem:[#allocation2 + $0x44] sm:$0xf]
    %v70 = vld [vmem:[#allocation2 + $0x48] sm:$0xf]
    %v71 = vld [vmem:[#allocation2 + $0x4c] sm:$0xf]
    %v72 = vld [vmem:[#allocation2 + $0x50] sm:$0xf]
    %v73 = vld [vmem:[#allocation2 + $0x54] sm:$0xf]
    %v74 = vld [vmem:[#allocation2 + $0x58] sm:$0xf]
    %v75 = vld [vmem:[#allocation2 + $0x5c] sm:$0xf]
    %v76 = vld [vmem:[#allocation2 + $0x60] sm:$0xf]
    %v77 = vld [vmem:[#allocation2 + $0x64] sm:$0xf]
    %v78 = vld [vmem:[#allocation2 + $0x68] sm:$0xf]
    %v79 = vld [vmem:[#allocation2 + $0x6c] sm:$0xf]
    %v80 = vld [vmem:[#allocation2 + $0x70] sm:$0xf]
    %v81 = vld [vmem:[#allocation2 + $0x74] sm:$0xf]
    %v82 = vld [vmem:[#allocation2 + $0x78] sm:$0xf]
    %v83 = vld [vmem:[#allocation2 + $0x7c] sm:$0xf]
    %v84 = vld [vmem:[#allocation2 + $0x80] sm:$0xf]
    %v85 = vld [vmem:[#allocation2 + $0x84] sm:$0xf]
    %v86 = vld [vmem:[#allocation2 + $0x88] sm:$0xf]
    %v87 = vld [vmem:[#allocation2 + $0x8c] sm:$0xf]
    %v88 = vld [vmem:[#allocation2 + $0x90] sm:$0xf]
    %v89 = vld [vmem:[#allocation2 + $0x94] sm:$0xf]
    %v90 = vld [vmem:[#allocation2 + $0x98] sm:$0xf]
    %v91 = vld [vmem:[#allocation2 + $0x9c] sm:$0xf]
    %v92 = vld [vmem:[#allocation2 + $0xa0] sm:$0xf]
    %v93 = vld [vmem:[#allocation2 + $0xa4] sm:$0xf]
    %v94 = vld [vmem:[#allocation2 + $0xa8] sm:$0xf]
    %v95 = vld [vmem:[#allocation2 + $0xac] sm:$0xf]
    %v96 = vld [vmem:[#allocation2 + $0xb0] sm:$0xf]
    %v97 = vld [vmem:[#allocation2 + $0xb4] sm:$0xf]
    %v98 = vld [vmem:[#allocation2 + $0xb8] sm:$0xf]
    %v99 = vld [vmem:[#allocation2 + $0xbc] sm:$0xf]
    %v100 = vld [vmem:[#allocation2 + $0xc0] sm:$0xf]
    %v101 = vld [vmem:[#allocation2 + $0xc4] sm:$0xf]
    %v102 = vld [vmem:[#allocation2 + $0xc8] sm:$0xf]
    %v103 = vld [vmem:[#allocation2 + $0xcc] sm:$0xf]
    %v104 = vld [vmem:[#allocation2 + $0xd0] sm:$0xf]
    %v105 = vld [vmem:[#allocation2 + $0xd4] sm:$0xf]
    %v106 = vld [vmem:[#allocation2 + $0xd8] sm:$0xf]
    %v107 = vld [vmem:[#allocation2 + $0xdc] sm:$0xf]
    %v108 = vld [vmem:[#allocation2 + $0xe0] sm:$0xf]
    %v109 = vld [vmem:[#allocation2 + $0xe4] sm:$0xf]
    %v110 = vld [vmem:[#allocation2 + $0xe8] sm:$0xf]
    %v111 = vld [vmem:[#allocation2 + $0xec] sm:$0xf]
    %v112 = vld [vmem:[#allocation2 + $0xf0] sm:$0xf]
    %v113 = vld [vmem:[#allocation2 + $0xf4] sm:$0xf]
    %v114 = vld [vmem:[#allocation2 + $0xf8] sm:$0xf]
    %v115 = vld [vmem:[#allocation2 + $0xfc] sm:$0xf]
    %v116 = vld [vmem:[#allocation2 + $0x100] sm:$0xf]
    %v117 = vld [vmem:[#allocation2 + $0x104] sm:$0xf]
    %v118 = vld [vmem:[#allocation2 + $0x108] sm:$0xf]
    %v119 = vld [vmem:[#allocation2 + $0x10c] sm:$0xf]
    %v120 = vld [vmem:[#allocation2 + $0x110] sm:$0xf]
    %v121 = vld [vmem:[#allocation2 + $0x114] sm:$0xf]
    %v122 = vld [vmem:[#allocation2 + $0x118] sm:$0xf]
    %v123 = vld [vmem:[#allocation2 + $0x11c] sm:$0xf]
    %v124 = vld [vmem:[#allocation2 + $0x120] sm:$0xf]
    %v125 = vld [vmem:[#allocation2 + $0x124] sm:$0xf]
    %v126 = vld [vmem:[#allocation2 + $0x128] sm:$0xf]
    %v127 = vld [vmem:[#allocation2 + $0x12c] sm:$0xf]
    %v128 = vld [vmem:[#allocation2 + $0x130] sm:$0xf]
    %v129 = vld [vmem:[#allocation2 + $0x134] sm:$0xf]
    %v130 = vld [vmem:[#allocation2 + $0x138] sm:$0xf]
    %v131 = vld [vmem:[#allocation2 + $0x13c] sm:$0xf]
    %v132 = vld [vmem:[#allocation2 + $0x140] sm:$0xf]
    %v133 = vld [vmem:[#allocation2 + $0x144] sm:$0xf]
    %v134 = vld [vmem:[#allocation2 + $0x148] sm:$0xf]
    %v135 = vld [vmem:[#allocation2 + $0x14c] sm:$0xf]
    %v136 = vld [vmem:[#allocation2 + $0x150] sm:$0xf]
    %v137 = vld [vmem:[#allocation2 + $0x154] sm:$0xf]
    %v138 = vld [vmem:[#allocation2 + $0x158] sm:$0xf]
    %v139 = vld [vmem:[#allocation2 + $0x15c] sm:$0xf]
    %v140 = vld [vmem:[#allocation2 + $0x160] sm:$0xf]
    %v141 = vld [vmem:[#allocation2 + $0x164] sm:$0xf]
    %v142 = vld [vmem:[#allocation2 + $0x168] sm:$0xf]
    %v143 = vld [vmem:[#allocation2 + $0x16c] sm:$0xf]
    %v144 = vld [vmem:[#allocation2 + $0x170] sm:$0xf]
    %v145 = vld [vmem:[#allocation2 + $0x174] sm:$0xf]
    %v146 = vld [vmem:[#allocation2 + $0x178] sm:$0xf]
    %v147 = vld [vmem:[#allocation2 + $0x17c] sm:$0xf]
    %v148 = vld [vmem:[#allocation2 + $0x180] sm:$0xf]
    %v149 = vld [vmem:[#allocation2 + $0x184] sm:$0xf]
    %v150 = vld [vmem:[#allocation2 + $0x188] sm:$0xf]
    %v151 = vld [vmem:[#allocation2 + $0x18c] sm:$0xf]
    %v152 = vld [vmem:[#allocation2 + $0x190] sm:$0xf]
    %v153 = vld [vmem:[#allocation2 + $0x194] sm:$0xf]
    %v154 = vld [vmem:[#allocation2 + $0x198] sm:$0xf]
    %v155 = vld [vmem:[#allocation2 + $0x19c] sm:$0xf]
    %v156 = vld [vmem:[#allocation2 + $0x1a0] sm:$0xf]
    %v157 = vld [vmem:[#allocation2 + $0x1a4] sm:$0xf]
    %v158 = vld [vmem:[#allocation2 + $0x1a8] sm:$0xf]
    %v159 = vld [vmem:[#allocation2 + $0x1ac] sm:$0xf]
    %v160 = vld [vmem:[#allocation2 + $0x1b0] sm:$0xf]
    %v161 = vld [vmem:[#allocation2 + $0x1b4] sm:$0xf]
    %v162 = vld [vmem:[#allocation2 + $0x1b8] sm:$0xf]
    %v163 = vld [vmem:[#allocation2 + $0x1bc] sm:$0xf]
    %v164 = vld [vmem:[#allocation2 + $0x1c0] sm:$0xf]
    %v165 = vld [vmem:[#allocation2 + $0x1c4] sm:$0xf]
    %v166 = vld [vmem:[#allocation2 + $0x1c8] sm:$0xf]
    %v167 = vld [vmem:[#allocation2 + $0x1cc] sm:$0xf]
    %v168 = vld [vmem:[#allocation2 + $0x1d0] sm:$0xf]
    %v169 = vld [vmem:[#allocation2 + $0x1d4] sm:$0xf]
    %v170 = vld [vmem:[#allocation2 + $0x1d8] sm:$0xf]
    %v171 = vld [vmem:[#allocation2 + $0x1dc] sm:$0xf]
    %v172 = vld [vmem:[#allocation2 + $0x1e0] sm:$0xf]
    %v173 = vld [vmem:[#allocation2 + $0x1e4] sm:$0xf]
    %v174 = vld [vmem:[#allocation2 + $0x1e8] sm:$0xf]
    %v175 = vld [vmem:[#allocation2 + $0x1ec] sm:$0xf]
    %v176 = vld [vmem:[#allocation2 + $0x1f0] sm:$0xf]
    %v177 = vld [vmem:[#allocation2 + $0x1f4] sm:$0xf]
    %v178 = vld [vmem:[#allocation2 + $0x1f8] sm:$0xf]
    %v179 = vld [vmem:[#allocation2 + $0x1fc] sm:$0xf]
    %v180 = vld [vmem:[#allocation2 + $0x200] sm:$0xf]
    %v181 = vld [vmem:[#allocation2 + $0x204] sm:$0xf]
    %v182 = vld [vmem:[#allocation2 + $0x208] sm:$0xf]
    %v183 = vld [vmem:[#allocation2 + $0x20c] sm:$0xf]
    %v184 = vld [vmem:[#allocation2 + $0x210] sm:$0xf]
    %v185 = vld [vmem:[#allocation2 + $0x214] sm:$0xf]
    %v186 = vld [vmem:[#allocation2 + $0x218] sm:$0xf]
    %v187 = vld [vmem:[#allocation2 + $0x21c] sm:$0xf]
    %v188 = vld [vmem:[#allocation2 + $0x220] sm:$0xf]
    %v189 = vld [vmem:[#allocation2 + $0x224] sm:$0xf]
    %v190 = vld [vmem:[#allocation2 + $0x228] sm:$0xf]
    %v191 = vld [vmem:[#allocation2 + $0x22c] sm:$0xf]
    %v192 = vld [vmem:[#allocation2 + $0x230] sm:$0xf]
    %v193 = vld [vmem:[#allocation2 + $0x234] sm:$0xf]
    %v194 = vld [vmem:[#allocation2 + $0x238] sm:$0xf]
    %v195 = vld [vmem:[#allocation2 + $0x23c] sm:$0xf]
    %v196 = vld [vmem:[#allocation2 + $0x240] sm:$0xf]
    %v197 = vld [vmem:[#allocation2 + $0x244] sm:$0xf]
    %v198 = vld [vmem:[#allocation2 + $0x248] sm:$0xf]
    %v199 = vld [vmem:[#allocation2 + $0x24c] sm:$0xf]
    %v200 = vld [vmem:[#allocation2 + $0x250] sm:$0xf]
    %v201 = vld [vmem:[#allocation2 + $0x254] sm:$0xf]
    %v202 = vld [vmem:[#allocation2 + $0x258] sm:$0xf]
    %v203 = vld [vmem:[#allocation2 + $0x25c] sm:$0xf]
    %v204 = vld [vmem:[#allocation2 + $0x260] sm:$0xf]
    %v205 = vld [vmem:[#allocation2 + $0x264] sm:$0xf]
    %v206 = vld [vmem:[#allocation2 + $0x268] sm:$0xf]
    %v207 = vld [vmem:[#allocation2 + $0x26c] sm:$0xf]
    %v208 = vld [vmem:[#allocation2 + $0x270] sm:$0xf]
    %v209 = vld [vmem:[#allocation2 + $0x274] sm:$0xf]
    %v210 = vld [vmem:[#allocation2 + $0x278] sm:$0xf]
    %v211 = vld [vmem:[#allocation2 + $0x27c] sm:$0xf]
    %v212 = vld [vmem:[#allocation2 + $0x280] sm:$0xf]
    %v213 = vld [vmem:[#allocation2 + $0x284] sm:$0xf]
    %v214 = vld [vmem:[#allocation2 + $0x288] sm:$0xf]
    %v215 = vld [vmem:[#allocation2 + $0x28c] sm:$0xf]
    %v216 = vld [vmem:[#allocation2 + $0x290] sm:$0xf]
    %v217 = vld [vmem:[#allocation2 + $0x294] sm:$0xf]
    %v218 = vld [vmem:[#allocation2 + $0x298] sm:$0xf]
    %v219 = vld [vmem:[#allocation2 + $0x29c] sm:$0xf]
    %v220 = vld [vmem:[#allocation2 + $0x2a0] sm:$0xf]
    %v221 = vld [vmem:[#allocation2 + $0x2a4] sm:$0xf]
    %v222 = vld [vmem:[#allocation2 + $0x2a8] sm:$0xf]
    %v223 = vld [vmem:[#allocation2 + $0x2ac] sm:$0xf]
    %v224 = vld [vmem:[#allocation2 + $0x2b0] sm:$0xf]
    %v225 = vld [vmem:[#allocation2 + $0x2b4] sm:$0xf]
    %v226 = vld [vmem:[#allocation2 + $0x2b8] sm:$0xf]
    %v227 = vld [vmem:[#allocation2 + $0x2bc] sm:$0xf]
    %v228 = vld [vmem:[#allocation2 + $0x2c0] sm:$0xf]
    %v229 = vld [vmem:[#allocation2 + $0x2c4] sm:$0xf]
    %v230 = vld [vmem:[#allocation2 + $0x2c8] sm:$0xf]
    %v231 = vld [vmem:[#allocation2 + $0x2cc] sm:$0xf]
    %v232 = vld [vmem:[#allocation2 + $0x2d0] sm:$0xf]
    %v233 = vld [vmem:[#allocation2 + $0x2d4] sm:$0xf]
    %v234 = vld [vmem:[#allocation2 + $0x2d8] sm:$0xf]
    %v235 = vld [vmem:[#allocation2 + $0x2dc] sm:$0xf]
    %v236 = vld [vmem:[#allocation2 + $0x2e0] sm:$0xf]
    %v237 = vld [vmem:[#allocation2 + $0x2e4] sm:$0xf]
    %v238 = vld [vmem:[#allocation2 + $0x2e8] sm:$0xf]
    %v239 = vld [vmem:[#allocation2 + $0x2ec] sm:$0xf]
    %v240 = vld [vmem:[#allocation2 + $0x2f0] sm:$0xf]
    %v241 = vld [vmem:[#allocation2 + $0x2f4] sm:$0xf]
    %v242 = vld [vmem:[#allocation2 + $0x2f8] sm:$0xf]
    %v243 = vld [vmem:[#allocation2 + $0x2fc] sm:$0xf]
    %v244 = vld [vmem:[#allocation2 + $0x300] sm:$0xf]
    %v245 = vld [vmem:[#allocation2 + $0x304] sm:$0xf]
    %v246 = vld [vmem:[#allocation2 + $0x308] sm:$0xf]
    %v247 = vld [vmem:[#allocation2 + $0x30c] sm:$0xf]
    %v248 = vld [vmem:[#allocation2 + $0x310] sm:$0xf]
    %v249 = vld [vmem:[#allocation2 + $0x314] sm:$0xf]
    %v250 = vld [vmem:[#allocation2 + $0x318] sm:$0xf]
    %v251 = vld [vmem:[#allocation2 + $0x31c] sm:$0xf]
    %v252 = vld [vmem:[#allocation2 + $0x320] sm:$0xf]
    %v253 = vld [vmem:[#allocation2 + $0x324] sm:$0xf]
    %v254 = vld [vmem:[#allocation2 + $0x328] sm:$0xf]
    %v255 = vld [vmem:[#allocation2 + $0x32c] sm:$0xf]
    %v256 = vld [vmem:[#allocation2 + $0x330] sm:$0xf]
    %v257 = vld [vmem:[#allocation2 + $0x334] sm:$0xf]
    %v258 = vld [vmem:[#allocation2 + $0x338] sm:$0xf]
    %v259 = vld [vmem:[#allocation2 + $0x33c] sm:$0xf]
    %v260 = vld [vmem:[#allocation2 + $0x340] sm:$0xf]
    %v261 = vld [vmem:[#allocation2 + $0x344] sm:$0xf]
    %v262 = vld [vmem:[#allocation2 + $0x348] sm:$0xf]
    %v263 = vld [vmem:[#allocation2 + $0x34c] sm:$0xf]
    %v264 = vld [vmem:[#allocation2 + $0x350] sm:$0xf]
    %v265 = vld [vmem:[#allocation2 + $0x354] sm:$0xf]
    %v266 = vld [vmem:[#allocation2 + $0x358] sm:$0xf]
    %v267 = vld [vmem:[#allocation2 + $0x35c] sm:$0xf]
    %v268 = vld [vmem:[#allocation2 + $0x360] sm:$0xf]
    %v269 = vld [vmem:[#allocation2 + $0x364] sm:$0xf]
    %v270 = vld [vmem:[#allocation2 + $0x368] sm:$0xf]
    %v271 = vld [vmem:[#allocation2 + $0x36c] sm:$0xf]
    %v272 = vld [vmem:[#allocation2 + $0x370] sm:$0xf]
    %v273 = vld [vmem:[#allocation2 + $0x374] sm:$0xf]
    %v274 = vld [vmem:[#allocation2 + $0x378] sm:$0xf]
    %v275 = vld [vmem:[#allocation2 + $0x37c] sm:$0xf]
    %v276 = vld [vmem:[#allocation2 + $0x380] sm:$0xf]
    %v277 = vld [vmem:[#allocation2 + $0x384] sm:$0xf]
    %v278 = vld [vmem:[#allocation2 + $0x388] sm:$0xf]
    %v279 = vld [vmem:[#allocation2 + $0x38c] sm:$0xf]
    %v280 = vld [vmem:[#allocation2 + $0x390] sm:$0xf]
    %v281 = vld [vmem:[#allocation2 + $0x394] sm:$0xf]
    %v282 = vld [vmem:[#allocation2 + $0x398] sm:$0xf]
    %v283 = vld [vmem:[#allocation2 + $0x39c] sm:$0xf]
    %v284 = vld [vmem:[#allocation2 + $0x3a0] sm:$0xf]
    %v285 = vld [vmem:[#allocation2 + $0x3a4] sm:$0xf]
    %v286 = vld [vmem:[#allocation2 + $0x3a8] sm:$0xf]
    %v287 = vld [vmem:[#allocation2 + $0x3ac] sm:$0xf]
    %v288 = vld [vmem:[#allocation2 + $0x3b0] sm:$0xf]
    %v289 = vld [vmem:[#allocation2 + $0x3b4] sm:$0xf]
    %v290 = vld [vmem:[#allocation2 + $0x3b8] sm:$0xf]
    %v291 = vld [vmem:[#allocation2 + $0x3bc] sm:$0xf]
    %v292 = vld [vmem:[#allocation2 + $0x3c0] sm:$0xf]
    %v293 = vld [vmem:[#allocation2 + $0x3c4] sm:$0xf]
    %v294 = vld [vmem:[#allocation2 + $0x3c8] sm:$0xf]
    %v295 = vld [vmem:[#allocation2 + $0x3cc] sm:$0xf]
    %v296 = vld [vmem:[#allocation2 + $0x3d0] sm:$0xf]
    %v297 = vld [vmem:[#allocation2 + $0x3d4] sm:$0xf]
    %v298 = vld [vmem:[#allocation2 + $0x3d8] sm:$0xf]
    %v299 = vld [vmem:[#allocation2 + $0x3dc] sm:$0xf]
    %v300 = vld [vmem:[#allocation2 + $0x3e0] sm:$0xf]
    %v301 = vld [vmem:[#allocation2 + $0x3e4] sm:$0xf]
    %v302 = vld [vmem:[#allocation2 + $0x3e8] sm:$0xf]
    %v303 = vld [vmem:[#allocation2 + $0x3ec] sm:$0xf]
    %v304 = vld [vmem:[#allocation2 + $0x3f0] sm:$0xf]
    %v305 = vld [vmem:[#allocation2 + $0x3f4] sm:$0xf]
    %v306 = vld [vmem:[#allocation2 + $0x3f8] sm:$0xf]
    %v307 = vld [vmem:[#allocation2 + $0x3fc] sm:$0xf]
    %v308 = vld [vmem:[#allocation2 + $0x400] sm:$0xf]
    %v309 = vld [vmem:[#allocation2 + $0x404] sm:$0xf]
    %v310 = vld [vmem:[#allocation2 + $0x408] sm:$0xf]
    %v311 = vld [vmem:[#allocation2 + $0x40c] sm:$0xf]
    %v312 = vld [vmem:[#allocation2 + $0x410] sm:$0xf]
    %v313 = vld [vmem:[#allocation2 + $0x414] sm:$0xf]
    %v314 = vld [vmem:[#allocation2 + $0x418] sm:$0xf]
    %v315 = vld [vmem:[#allocation2 + $0x41c] sm:$0xf]
    %v316 = vld [vmem:[#allocation2 + $0x420] sm:$0xf]
    %v317 = vld [vmem:[#allocation2 + $0x424] sm:$0xf]
    %v318 = vld [vmem:[#allocation2 + $0x428] sm:$0xf]
    %v319 = vld [vmem:[#allocation2 + $0x42c] sm:$0xf]
    %v320 = vld [vmem:[#allocation2 + $0x430] sm:$0xf]
    %v321 = vld [vmem:[#allocation2 + $0x434] sm:$0xf]
    %v322 = vld [vmem:[#allocation2 + $0x438] sm:$0xf]
    %v323 = vld [vmem:[#allocation2 + $0x43c] sm:$0xf]
    %v324 = vld [vmem:[#allocation2 + $0x440] sm:$0xf]
    %v325 = vld [vmem:[#allocation2 + $0x444] sm:$0xf]
    %v326 = vld [vmem:[#allocation2 + $0x448] sm:$0xf]
    %v327 = vld [vmem:[#allocation2 + $0x44c] sm:$0xf]
    %v328 = vld [vmem:[#allocation2 + $0x450] sm:$0xf]
    %v329 = vld [vmem:[#allocation2 + $0x454] sm:$0xf]
    %v330 = vld [vmem:[#allocation2 + $0x458] sm:$0xf]
    %v331 = vld [vmem:[#allocation2 + $0x45c] sm:$0xf]
    %v332 = vld [vmem:[#allocation2 + $0x460] sm:$0xf]
    %v333 = vld [vmem:[#allocation2 + $0x464] sm:$0xf]
    %v334 = vld [vmem:[#allocation2 + $0x468] sm:$0xf]
    %v335 = vld [vmem:[#allocation2 + $0x46c] sm:$0xf]
    %v336 = vld [vmem:[#allocation2 + $0x470] sm:$0xf]
    %v337 = vld [vmem:[#allocation2 + $0x474] sm:$0xf]
    %v338 = vld [vmem:[#allocation2 + $0x478] sm:$0xf]
    %v339 = vld [vmem:[#allocation2 + $0x47c] sm:$0xf]
    %v340 = vld [vmem:[#allocation2 + $0x480] sm:$0xf]
    %v341 = vld [vmem:[#allocation2 + $0x484] sm:$0xf]
    %v342 = vld [vmem:[#allocation2 + $0x488] sm:$0xf]
    %v343 = vld [vmem:[#allocation2 + $0x48c] sm:$0xf]
    %v344 = vld [vmem:[#allocation2 + $0x490] sm:$0xf]
    %v345 = vld [vmem:[#allocation2 + $0x494] sm:$0xf]
    %v346 = vld [vmem:[#allocation2 + $0x498] sm:$0xf]
    %v347 = vld [vmem:[#allocation2 + $0x49c] sm:$0xf]
    %v348 = vld [vmem:[#allocation2 + $0x4a0] sm:$0xf]
    %v349 = vld [vmem:[#allocation2 + $0x4a4] sm:$0xf]
    %v350 = vld [vmem:[#allocation2 + $0x4a8] sm:$0xf]
    %v351 = vld [vmem:[#allocation2 + $0x4ac] sm:$0xf]
    %v352 = vld [vmem:[#allocation2 + $0x4b0] sm:$0xf]
    %v353 = vld [vmem:[#allocation2 + $0x4b4] sm:$0xf]
    %v354 = vld [vmem:[#allocation2 + $0x4b8] sm:$0xf]
    %v355 = vld [vmem:[#allocation2 + $0x4bc] sm:$0xf]
    %v356 = vld [vmem:[#allocation2 + $0x4c0] sm:$0xf]
    %v357 = vld [vmem:[#allocation2 + $0x4c4] sm:$0xf]
    %v358 = vld [vmem:[#allocation2 + $0x4c8] sm:$0xf]
    %v359 = vld [vmem:[#allocation2 + $0x4cc] sm:$0xf]
    %v360 = vld [vmem:[#allocation2 + $0x4d0] sm:$0xf]
    %v361 = vld [vmem:[#allocation2 + $0x4d4] sm:$0xf]
    %v362 = vld [vmem:[#allocation2 + $0x4d8] sm:$0xf]
    %v363 = vld [vmem:[#allocation2 + $0x4dc] sm:$0xf]
    %v364 = vld [vmem:[#allocation2 + $0x4e0] sm:$0xf]
    %v365 = vld [vmem:[#allocation2 + $0x4e4] sm:$0xf]
    %v366 = vld [vmem:[#allocation2 + $0x4e8] sm:$0xf]
    %v367 = vld [vmem:[#allocation2 + $0x4ec] sm:$0xf]
    %v368 = vld [vmem:[#allocation2 + $0x4f0] sm:$0xf]
    %v369 = vld [vmem:[#allocation2 + $0x4f4] sm:$0xf]
    %v370 = vld [vmem:[#allocation2 + $0x4f8] sm:$0xf]
    %v371 = vld [vmem:[#allocation2 + $0x4fc] sm:$0xf]
    %v372 = vld [vmem:[#allocation2 + $0x500] sm:$0xf]
    %v373 = vld [vmem:[#allocation2 + $0x504] sm:$0xf]
    %v374 = vld [vmem:[#allocation2 + $0x508] sm:$0xf]
    %v375 = vld [vmem:[#allocation2 + $0x50c] sm:$0xf]
    %v376 = vld [vmem:[#allocation2 + $0x510] sm:$0xf]
    %v377 = vld [vmem:[#allocation2 + $0x514] sm:$0xf]
    %v378 = vld [vmem:[#allocation2 + $0x518] sm:$0xf]
    %v379 = vld [vmem:[#allocation2 + $0x51c] sm:$0xf]
    %v380 = vld [vmem:[#allocation2 + $0x520] sm:$0xf]
    %v381 = vld [vmem:[#allocation2 + $0x524] sm:$0xf]
    %v382 = vld [vmem:[#allocation2 + $0x528] sm:$0xf]
    %v383 = vld [vmem:[#allocation2 + $0x52c] sm:$0xf]
    %v384 = vld [vmem:[#allocation2 + $0x530] sm:$0xf]
    %v385 = vld [vmem:[#allocation2 + $0x534] sm:$0xf]
    %v386 = vld [vmem:[#allocation2 + $0x538] sm:$0xf]
    %v387 = vld [vmem:[#allocation2 + $0x53c] sm:$0xf]
    %v388 = vld [vmem:[#allocation2 + $0x540] sm:$0xf]
    %v389 = vld [vmem:[#allocation2 + $0x544] sm:$0xf]
    %v390 = vld [vmem:[#allocation2 + $0x548] sm:$0xf]
    %v391 = vld [vmem:[#allocation2 + $0x54c] sm:$0xf]
    %v392 = vld [vmem:[#allocation2 + $0x550] sm:$0xf]
    %v393 = vld [vmem:[#allocation2 + $0x554] sm:$0xf]
    %v394 = vld [vmem:[#allocation2 + $0x558] sm:$0xf]
    %v395 = vld [vmem:[#allocation2 + $0x55c] sm:$0xf]
    %v396 = vld [vmem:[#allocation2 + $0x560] sm:$0xf]
    %v397 = vld [vmem:[#allocation2 + $0x564] sm:$0xf]
    %v398 = vld [vmem:[#allocation2 + $0x568] sm:$0xf]
    %v399 = vld [vmem:[#allocation2 + $0x56c] sm:$0xf]
    %v400 = vld [vmem:[#allocation2 + $0x570] sm:$0xf]
    %v401 = vld [vmem:[#allocation2 + $0x574] sm:$0xf]
    %v402 = vld [vmem:[#allocation2 + $0x578] sm:$0xf]
    %v403 = vld [vmem:[#allocation2 + $0x57c] sm:$0xf]
    %v404 = vld [vmem:[#allocation2 + $0x580] sm:$0xf]
    %v405 = vld [vmem:[#allocation2 + $0x584] sm:$0xf]
    %v406 = vld [vmem:[#allocation2 + $0x588] sm:$0xf]
    %v407 = vld [vmem:[#allocation2 + $0x58c] sm:$0xf]
    %v408 = vld [vmem:[#allocation2 + $0x590] sm:$0xf]
    %v409 = vld [vmem:[#allocation2 + $0x594] sm:$0xf]
    %v410 = vld [vmem:[#allocation2 + $0x598] sm:$0xf]
    %v411 = vld [vmem:[#allocation2 + $0x59c] sm:$0xf]
    %v412 = vld [vmem:[#allocation2 + $0x5a0] sm:$0xf]
    %v413 = vld [vmem:[#allocation2 + $0x5a4] sm:$0xf]
    %v414 = vld [vmem:[#allocation2 + $0x5a8] sm:$0xf]
    %v415 = vld [vmem:[#allocation2 + $0x5ac] sm:$0xf]
    %v416 = vld [vmem:[#allocation2 + $0x5b0] sm:$0xf]
    %v417 = vld [vmem:[#allocation2 + $0x5b4] sm:$0xf]
    %v418 = vld [vmem:[#allocation2 + $0x5b8] sm:$0xf]
    %v419 = vld [vmem:[#allocation2 + $0x5bc] sm:$0xf]
    %v420 = vld [vmem:[#allocation2 + $0x5c0] sm:$0xf]
    %v421 = vld [vmem:[#allocation2 + $0x5c4] sm:$0xf]
    %v422 = vld [vmem:[#allocation2 + $0x5c8] sm:$0xf]
    %v423 = vld [vmem:[#allocation2 + $0x5cc] sm:$0xf]
    %v424 = vld [vmem:[#allocation2 + $0x5d0] sm:$0xf]
    %v425 = vld [vmem:[#allocation2 + $0x5d4] sm:$0xf]
    %v426 = vld [vmem:[#allocation2 + $0x5d8] sm:$0xf]
    %v427 = vld [vmem:[#allocation2 + $0x5dc] sm:$0xf]
    %v428 = vld [vmem:[#allocation2 + $0x5e0] sm:$0xf]
    %v429 = vld [vmem:[#allocation2 + $0x5e4] sm:$0xf]
    %v430 = vld [vmem:[#allocation2 + $0x5e8] sm:$0xf]
    %v431 = vld [vmem:[#allocation2 + $0x5ec] sm:$0xf]
    %v432 = vld [vmem:[#allocation2 + $0x5f0] sm:$0xf]
    %v433 = vld [vmem:[#allocation2 + $0x5f4] sm:$0xf]
    %v434 = vld [vmem:[#allocation2 + $0x5f8] sm:$0xf]
    %v435 = vld [vmem:[#allocation2 + $0x5fc] sm:$0xf]
    %v436 = vld [vmem:[#allocation2 + $0x600] sm:$0xf]
    %v437 = vld [vmem:[#allocation2 + $0x604] sm:$0xf]
    %v438 = vld [vmem:[#allocation2 + $0x608] sm:$0xf]
    %v439 = vld [vmem:[#allocation2 + $0x60c] sm:$0xf]
    %v440 = vld [vmem:[#allocation2 + $0x610] sm:$0xf]
    %v441 = vld [vmem:[#allocation2 + $0x614] sm:$0xf]
    %v442 = vld [vmem:[#allocation2 + $0x618] sm:$0xf]
    %v443 = vld [vmem:[#allocation2 + $0x61c] sm:$0xf]
    %v444 = vld [vmem:[#allocation2 + $0x620] sm:$0xf]
    %v445 = vld [vmem:[#allocation2 + $0x624] sm:$0xf]
    %v446 = vld [vmem:[#allocation2 + $0x628] sm:$0xf]
    %v447 = vld [vmem:[#allocation2 + $0x62c] sm:$0xf]
    %v448 = vld [vmem:[#allocation2 + $0x630] sm:$0xf]
    %v449 = vld [vmem:[#allocation2 + $0x634] sm:$0xf]
    %v450 = vld [vmem:[#allocation2 + $0x638] sm:$0xf]
    %v451 = vld [vmem:[#allocation2 + $0x63c] sm:$0xf]
    %v452 = vld [vmem:[#allocation2 + $0x640] sm:$0xf]
    %v453 = vld [vmem:[#allocation2 + $0x644] sm:$0xf]
    %v454 = vld [vmem:[#allocation2 + $0x648] sm:$0xf]
    %v455 = vld [vmem:[#allocation2 + $0x64c] sm:$0xf]
    %v456 = vld [vmem:[#allocation2 + $0x650] sm:$0xf]
    %v457 = vld [vmem:[#allocation2 + $0x654] sm:$0xf]
    %v458 = vld [vmem:[#allocation2 + $0x658] sm:$0xf]
    %v459 = vld [vmem:[#allocation2 + $0x65c] sm:$0xf]
    %v460 = vld [vmem:[#allocation2 + $0x660] sm:$0xf]
    %v461 = vld [vmem:[#allocation2 + $0x664] sm:$0xf]
    %v462 = vld [vmem:[#allocation2 + $0x668] sm:$0xf]
    %v463 = vld [vmem:[#allocation2 + $0x66c] sm:$0xf]
    %v464 = vld [vmem:[#allocation2 + $0x670] sm:$0xf]
    %v465 = vld [vmem:[#allocation2 + $0x674] sm:$0xf]
    %v466 = vld [vmem:[#allocation2 + $0x678] sm:$0xf]
    %v467 = vld [vmem:[#allocation2 + $0x67c] sm:$0xf]
    %v468 = vld [vmem:[#allocation2 + $0x680] sm:$0xf]
    %v469 = vld [vmem:[#allocation2 + $0x684] sm:$0xf]
    %v470 = vld [vmem:[#allocation2 + $0x688] sm:$0xf]
    %v471 = vld [vmem:[#allocation2 + $0x68c] sm:$0xf]
    %v472 = vld [vmem:[#allocation2 + $0x690] sm:$0xf]
    %v473 = vld [vmem:[#allocation2 + $0x694] sm:$0xf]
    %v474 = vld [vmem:[#allocation2 + $0x698] sm:$0xf]
    %v475 = vld [vmem:[#allocation2 + $0x69c] sm:$0xf]
    %v476 = vld [vmem:[#allocation2 + $0x6a0] sm:$0xf]
    %v477 = vld [vmem:[#allocation2 + $0x6a4] sm:$0xf]
    %v478 = vld [vmem:[#allocation2 + $0x6a8] sm:$0xf]
    %v479 = vld [vmem:[#allocation2 + $0x6ac] sm:$0xf]
    %v480 = vld [vmem:[#allocation2 + $0x6b0] sm:$0xf]
    %v481 = vld [vmem:[#allocation2 + $0x6b4] sm:$0xf]
    %v482 = vld [vmem:[#allocation2 + $0x6b8] sm:$0xf]
    %v483 = vld [vmem:[#allocation2 + $0x6bc] sm:$0xf]
    %v484 = vld [vmem:[#allocation2 + $0x6c0] sm:$0xf]
    %v485 = vld [vmem:[#allocation2 + $0x6c4] sm:$0xf]
    %v486 = vld [vmem:[#allocation2 + $0x6c8] sm:$0xf]
    %v487 = vld [vmem:[#allocation2 + $0x6cc] sm:$0xf]
    %v488 = vld [vmem:[#allocation2 + $0x6d0] sm:$0xf]
    %v489 = vld [vmem:[#allocation2 + $0x6d4] sm:$0xf]
    %v490 = vld [vmem:[#allocation2 + $0x6d8] sm:$0xf]
    %v491 = vld [vmem:[#allocation2 + $0x6dc] sm:$0xf]
    %v492 = vld [vmem:[#allocation2 + $0x6e0] sm:$0xf]
    %v493 = vld [vmem:[#allocation2 + $0x6e4] sm:$0xf]
    %v494 = vld [vmem:[#allocation2 + $0x6e8] sm:$0xf]
    %v495 = vld [vmem:[#allocation2 + $0x6ec] sm:$0xf]
    %v496 = vld [vmem:[#allocation2 + $0x6f0] sm:$0xf]
    %v497 = vld [vmem:[#allocation2 + $0x6f4] sm:$0xf]
    %v498 = vld [vmem:[#allocation2 + $0x6f8] sm:$0xf]
    %v499 = vld [vmem:[#allocation2 + $0x6fc] sm:$0xf]
    %v500 = vld [vmem:[#allocation2 + $0x700] sm:$0xf]
    %v501 = vld [vmem:[#allocation2 + $0x704] sm:$0xf]
    %v502 = vld [vmem:[#allocation2 + $0x708] sm:$0xf]
    %v503 = vld [vmem:[#allocation2 + $0x70c] sm:$0xf]
    %v504 = vld [vmem:[#allocation2 + $0x710] sm:$0xf]
    %v505 = vld [vmem:[#allocation2 + $0x714] sm:$0xf]
    %v506 = vld [vmem:[#allocation2 + $0x718] sm:$0xf]
    %v507 = vld [vmem:[#allocation2 + $0x71c] sm:$0xf]
    %v508 = vld [vmem:[#allocation2 + $0x720] sm:$0xf]
    %v509 = vld [vmem:[#allocation2 + $0x724] sm:$0xf]
    %v510 = vld [vmem:[#allocation2 + $0x728] sm:$0xf]
    %v511 = vld [vmem:[#allocation2 + $0x72c] sm:$0xf]
    %v512 = vld [vmem:[#allocation2 + $0x730] sm:$0xf]
    %v513 = vld [vmem:[#allocation2 + $0x734] sm:$0xf]
    %v514 = vld [vmem:[#allocation2 + $0x738] sm:$0xf]
    %v515 = vld [vmem:[#allocation2 + $0x73c] sm:$0xf]
    %v516 = vld [vmem:[#allocation2 + $0x740] sm:$0xf]
    %v517 = vld [vmem:[#allocation2 + $0x744] sm:$0xf]
    %v518 = vld [vmem:[#allocation2 + $0x748] sm:$0xf]
    %v519 = vld [vmem:[#allocation2 + $0x74c] sm:$0xf]
    %v520 = vld [vmem:[#allocation2 + $0x750] sm:$0xf]
    %v521 = vld [vmem:[#allocation2 + $0x754] sm:$0xf]
    %v522 = vld [vmem:[#allocation2 + $0x758] sm:$0xf]
    %v523 = vld [vmem:[#allocation2 + $0x75c] sm:$0xf]
    %v524 = vld [vmem:[#allocation2 + $0x760] sm:$0xf]
    %v525 = vld [vmem:[#allocation2 + $0x764] sm:$0xf]
    %v526 = vld [vmem:[#allocation2 + $0x768] sm:$0xf]
    %v527 = vld [vmem:[#allocation2 + $0x76c] sm:$0xf]
    %v528 = vld [vmem:[#allocation2 + $0x770] sm:$0xf]
    %v529 = vld [vmem:[#allocation2 + $0x774] sm:$0xf]
    %v530 = vld [vmem:[#allocation2 + $0x778] sm:$0xf]
    %v531 = vld [vmem:[#allocation2 + $0x77c] sm:$0xf]
    %v532 = vld [vmem:[#allocation2 + $0x780] sm:$0xf]
    %v533 = vld [vmem:[#allocation2 + $0x784] sm:$0xf]
    %v534 = vld [vmem:[#allocation2 + $0x788] sm:$0xf]
    %v535 = vld [vmem:[#allocation2 + $0x78c] sm:$0xf]
    %v536 = vld [vmem:[#allocation2 + $0x790] sm:$0xf]
    %v537 = vld [vmem:[#allocation2 + $0x794] sm:$0xf]
    %v538 = vld [vmem:[#allocation2 + $0x798] sm:$0xf]
    %v539 = vld [vmem:[#allocation2 + $0x79c] sm:$0xf]
    %v540 = vld [vmem:[#allocation2 + $0x7a0] sm:$0xf]
    %v541 = vld [vmem:[#allocation2 + $0x7a4] sm:$0xf]
    %v542 = vld [vmem:[#allocation2 + $0x7a8] sm:$0xf]
    %v543 = vld [vmem:[#allocation2 + $0x7ac] sm:$0xf]
    %v544 = vld [vmem:[#allocation2 + $0x7b0] sm:$0xf]
    %v545 = vld [vmem:[#allocation2 + $0x7b4] sm:$0xf]
    %v546 = vld [vmem:[#allocation2 + $0x7b8] sm:$0xf]
    %v547 = vld [vmem:[#allocation2 + $0x7bc] sm:$0xf]
    %v548 = vld [vmem:[#allocation2 + $0x7c0] sm:$0xf]
    %v549 = vld [vmem:[#allocation2 + $0x7c4] sm:$0xf]
    %v550 = vld [vmem:[#allocation2 + $0x7c8] sm:$0xf]
    %v551 = vld [vmem:[#allocation2 + $0x7cc] sm:$0xf]
    %v552 = vld [vmem:[#allocation2 + $0x7d0] sm:$0xf]
    %v553 = vld [vmem:[#allocation2 + $0x7d4] sm:$0xf]
    %v554 = vld [vmem:[#allocation2 + $0x7d8] sm:$0xf]
    %v555 = vld [vmem:[#allocation2 + $0x7dc] sm:$0xf]
    %v556 = vld [vmem:[#allocation2 + $0x7e0] sm:$0xf]
    %v557 = vld [vmem:[#allocation2 + $0x7e4] sm:$0xf]
    %v558 = vld [vmem:[#allocation2 + $0x7e8] sm:$0xf]
    %v559 = vld [vmem:[#allocation2 + $0x7ec] sm:$0xf]
    %v560 = vld [vmem:[#allocation2 + $0x7f0] sm:$0xf]
    %v561 = vld [vmem:[#allocation2 + $0x7f4] sm:$0xf]
    %v562 = vld [vmem:[#allocation2 + $0x7f8] sm:$0xf]
    %v563 = vld [vmem:[#allocation2 + $0x7fc] sm:$0xf]
    %v564 = vld [vmem:[%s4] sm:$0x1]
    %v565 = vlaneseq
    %v566 = vshrl.u32 %v565, 7
    %v567 = vsub.s32 0, %v566
    %v568 = vrot.slane %v564, %v567
    %v585 = vunpack.c.l.b16 %v36
    %v586 = vunpack.c.h.b16 %v36
    %v587 = vunpack.c.l.b16 %v37
    %v588 = vunpack.c.h.b16 %v37
    %v589 = vunpack.c.l.b16 %v38
    %v590 = vunpack.c.h.b16 %v38
    %v591 = vunpack.c.l.b16 %v39
    %v592 = vunpack.c.h.b16 %v39
    %v593 = vunpack.c.l.b16 %v40
    %v594 = vunpack.c.h.b16 %v40
    %v595 = vunpack.c.l.b16 %v41
    %v596 = vunpack.c.h.b16 %v41
    %v597 = vunpack.c.l.b16 %v42
    %v598 = vunpack.c.h.b16 %v42
    %v599 = vunpack.c.l.b16 %v43
    %v600 = vunpack.c.h.b16 %v43
    %v601 = vunpack.c.l.b16 %v44
    %v602 = vunpack.c.h.b16 %v44
    %v603 = vunpack.c.l.b16 %v45
    %v604 = vunpack.c.h.b16 %v45
    %v605 = vunpack.c.l.b16 %v46
    %v606 = vunpack.c.h.b16 %v46
    %v607 = vunpack.c.l.b16 %v47
    %v608 = vunpack.c.h.b16 %v47
    %v609 = vunpack.c.l.b16 %v48
    %v610 = vunpack.c.h.b16 %v48
    %v611 = vunpack.c.l.b16 %v49
    %v612 = vunpack.c.h.b16 %v49
    %v613 = vunpack.c.l.b16 %v50
    %v614 = vunpack.c.h.b16 %v50
    %v615 = vunpack.c.l.b16 %v51
    %v616 = vunpack.c.h.b16 %v51
    %v617 = vpack.c.b16 %v585, %v585
    %v618 = vpack.c.b16 %v586, %v586
    %v619 = vpack.c.b16 %v587, %v587
    %v620 = vpack.c.b16 %v588, %v588
    %v621 = vpack.c.b16 %v589, %v589
    %v622 = vpack.c.b16 %v590, %v590
    %v623 = vpack.c.b16 %v591, %v591
    %v624 = vpack.c.b16 %v592, %v592
    %v625 = vpack.c.b16 %v593, %v593
    %v626 = vpack.c.b16 %v594, %v594
    %v627 = vpack.c.b16 %v595, %v595
    %v628 = vpack.c.b16 %v596, %v596
    %v629 = vpack.c.b16 %v597, %v597
    %v630 = vpack.c.b16 %v598, %v598
    %v631 = vpack.c.b16 %v599, %v599
    %v632 = vpack.c.b16 %v600, %v600
    %v633 = vpack.c.b16 %v601, %v601
    %v634 = vpack.c.b16 %v602, %v602
    %v635 = vpack.c.b16 %v603, %v603
    %v636 = vpack.c.b16 %v604, %v604
    %v637 = vpack.c.b16 %v605, %v605
    %v638 = vpack.c.b16 %v606, %v606
    %v639 = vpack.c.b16 %v607, %v607
    %v640 = vpack.c.b16 %v608, %v608
    %v641 = vpack.c.b16 %v609, %v609
    %v642 = vpack.c.b16 %v610, %v610
    %v643 = vpack.c.b16 %v611, %v611
    %v644 = vpack.c.b16 %v612, %v612
    %v645 = vpack.c.b16 %v613, %v613
    %v646 = vpack.c.b16 %v614, %v614
    %v647 = vpack.c.b16 %v615, %v615
    %v648 = vpack.c.b16 %v616, %v616
    %v1193 = vunpack.c.l.b16 %v52
    %v1194 = vunpack.c.l.b16 %v53
    %v1195 = vunpack.c.l.b16 %v54
    %v1196 = vunpack.c.l.b16 %v55
    %v1197 = vunpack.c.l.b16 %v56
    %v1198 = vunpack.c.l.b16 %v57
    %v1199 = vunpack.c.l.b16 %v58
    %v1200 = vunpack.c.l.b16 %v59
    %v1201 = vunpack.c.l.b16 %v60
    %v1202 = vunpack.c.l.b16 %v61
    %v1203 = vunpack.c.l.b16 %v62
    %v1204 = vunpack.c.l.b16 %v63
    %v1205 = vunpack.c.l.b16 %v64
    %v1206 = vunpack.c.l.b16 %v65
    %v1207 = vunpack.c.l.b16 %v66
    %v1208 = vunpack.c.l.b16 %v67
    %v1209 = vunpack.c.l.b16 %v68
    %v1210 = vunpack.c.l.b16 %v69
    %v1211 = vunpack.c.l.b16 %v70
    %v1212 = vunpack.c.l.b16 %v71
    %v1213 = vunpack.c.l.b16 %v72
    %v1214 = vunpack.c.l.b16 %v73
    %v1215 = vunpack.c.l.b16 %v74
    %v1216 = vunpack.c.l.b16 %v75
    %v1217 = vunpack.c.l.b16 %v76
    %v1218 = vunpack.c.l.b16 %v77
    %v1219 = vunpack.c.l.b16 %v78
    %v1220 = vunpack.c.l.b16 %v79
    %v1221 = vunpack.c.l.b16 %v80
    %v1222 = vunpack.c.l.b16 %v81
    %v1223 = vunpack.c.l.b16 %v82
    %v1224 = vunpack.c.l.b16 %v83
    %v1225 = vunpack.c.l.b16 %v84
    %v1226 = vunpack.c.l.b16 %v85
    %v1227 = vunpack.c.l.b16 %v86
    %v1228 = vunpack.c.l.b16 %v87
    %v1229 = vunpack.c.l.b16 %v88
    %v1230 = vunpack.c.l.b16 %v89
    %v1231 = vunpack.c.l.b16 %v90
    %v1232 = vunpack.c.l.b16 %v91
    %v1233 = vunpack.c.l.b16 %v92
    %v1234 = vunpack.c.l.b16 %v93
    %v1235 = vunpack.c.l.b16 %v94
    %v1236 = vunpack.c.l.b16 %v95
    %v1237 = vunpack.c.l.b16 %v96
    %v1238 = vunpack.c.l.b16 %v97
    %v1239 = vunpack.c.l.b16 %v98
    %v1240 = vunpack.c.l.b16 %v99
    %v1241 = vunpack.c.l.b16 %v100
    %v1242 = vunpack.c.l.b16 %v101
    %v1243 = vunpack.c.l.b16 %v102
    %v1244 = vunpack.c.l.b16 %v103
    %v1245 = vunpack.c.l.b16 %v104
    %v1246 = vunpack.c.l.b16 %v105
    %v1247 = vunpack.c.l.b16 %v106
    %v1248 = vunpack.c.l.b16 %v107
    %v1249 = vunpack.c.l.b16 %v108
    %v1250 = vunpack.c.l.b16 %v109
    %v1251 = vunpack.c.l.b16 %v110
    %v1252 = vunpack.c.l.b16 %v111
    %v1253 = vunpack.c.l.b16 %v112
    %v1254 = vunpack.c.l.b16 %v113
    %v1255 = vunpack.c.l.b16 %v114
    %v1256 = vunpack.c.l.b16 %v115
    %v1257 = vunpack.c.l.b16 %v116
    %v1258 = vunpack.c.l.b16 %v117
    %v1259 = vunpack.c.l.b16 %v118
    %v1260 = vunpack.c.l.b16 %v119
    %v1261 = vunpack.c.l.b16 %v120
    %v1262 = vunpack.c.l.b16 %v121
    %v1263 = vunpack.c.l.b16 %v122
    %v1264 = vunpack.c.l.b16 %v123
    %v1265 = vunpack.c.l.b16 %v124
    %v1266 = vunpack.c.l.b16 %v125
    %v1267 = vunpack.c.l.b16 %v126
    %v1268 = vunpack.c.l.b16 %v127
    %v1269 = vunpack.c.l.b16 %v128
    %v1270 = vunpack.c.l.b16 %v129
    %v1271 = vunpack.c.l.b16 %v130
    %v1272 = vunpack.c.l.b16 %v131
    %v1273 = vunpack.c.l.b16 %v132
    %v1274 = vunpack.c.l.b16 %v133
    %v1275 = vunpack.c.l.b16 %v134
    %v1276 = vunpack.c.l.b16 %v135
    %v1277 = vunpack.c.l.b16 %v136
    %v1278 = vunpack.c.l.b16 %v137
    %v1279 = vunpack.c.l.b16 %v138
    %v1280 = vunpack.c.l.b16 %v139
    %v1281 = vunpack.c.l.b16 %v140
    %v1282 = vunpack.c.l.b16 %v141
    %v1283 = vunpack.c.l.b16 %v142
    %v1284 = vunpack.c.l.b16 %v143
    %v1285 = vunpack.c.l.b16 %v144
    %v1286 = vunpack.c.l.b16 %v145
    %v1287 = vunpack.c.l.b16 %v146
    %v1288 = vunpack.c.l.b16 %v147
    %v1289 = vunpack.c.l.b16 %v148
    %v1290 = vunpack.c.l.b16 %v149
    %v1291 = vunpack.c.l.b16 %v150
    %v1292 = vunpack.c.l.b16 %v151
    %v1293 = vunpack.c.l.b16 %v152
    %v1294 = vunpack.c.l.b16 %v153
    %v1295 = vunpack.c.l.b16 %v154
    %v1296 = vunpack.c.l.b16 %v155
    %v1297 = vunpack.c.l.b16 %v156
    %v1298 = vunpack.c.l.b16 %v157
    %v1299 = vunpack.c.l.b16 %v158
    %v1300 = vunpack.c.l.b16 %v159
    %v1301 = vunpack.c.l.b16 %v160
    %v1302 = vunpack.c.l.b16 %v161
    %v1303 = vunpack.c.l.b16 %v162
    %v1304 = vunpack.c.l.b16 %v163
    %v1305 = vunpack.c.l.b16 %v164
    %v1306 = vunpack.c.l.b16 %v165
    %v1307 = vunpack.c.l.b16 %v166
    %v1308 = vunpack.c.l.b16 %v167
    %v1309 = vunpack.c.l.b16 %v168
    %v1310 = vunpack.c.l.b16 %v169
    %v1311 = vunpack.c.l.b16 %v170
    %v1312 = vunpack.c.l.b16 %v171
    %v1313 = vunpack.c.l.b16 %v172
    %v1314 = vunpack.c.l.b16 %v173
    %v1315 = vunpack.c.l.b16 %v174
    %v1316 = vunpack.c.l.b16 %v175
    %v1317 = vunpack.c.l.b16 %v176
    %v1318 = vunpack.c.l.b16 %v177
    %v1319 = vunpack.c.l.b16 %v178
    %v1320 = vunpack.c.l.b16 %v179
    %v1321 = vunpack.c.l.b16 %v180
    %v1322 = vunpack.c.l.b16 %v181
    %v1323 = vunpack.c.l.b16 %v182
    %v1324 = vunpack.c.l.b16 %v183
    %v1325 = vunpack.c.l.b16 %v184
    %v1326 = vunpack.c.l.b16 %v185
    %v1327 = vunpack.c.l.b16 %v186
    %v1328 = vunpack.c.l.b16 %v187
    %v1329 = vunpack.c.l.b16 %v188
    %v1330 = vunpack.c.l.b16 %v189
    %v1331 = vunpack.c.l.b16 %v190
    %v1332 = vunpack.c.l.b16 %v191
    %v1333 = vunpack.c.l.b16 %v192
    %v1334 = vunpack.c.l.b16 %v193
    %v1335 = vunpack.c.l.b16 %v194
    %v1336 = vunpack.c.l.b16 %v195
    %v1337 = vunpack.c.l.b16 %v196
    %v1338 = vunpack.c.l.b16 %v197
    %v1339 = vunpack.c.l.b16 %v198
    %v1340 = vunpack.c.l.b16 %v199
    %v1341 = vunpack.c.l.b16 %v200
    %v1342 = vunpack.c.l.b16 %v201
    %v1343 = vunpack.c.l.b16 %v202
    %v1344 = vunpack.c.l.b16 %v203
    %v1345 = vunpack.c.l.b16 %v204
    %v1346 = vunpack.c.l.b16 %v205
    %v1347 = vunpack.c.l.b16 %v206
    %v1348 = vunpack.c.l.b16 %v207
    %v1349 = vunpack.c.l.b16 %v208
    %v1350 = vunpack.c.l.b16 %v209
    %v1351 = vunpack.c.l.b16 %v210
    %v1352 = vunpack.c.l.b16 %v211
    %v1353 = vunpack.c.l.b16 %v212
    %v1354 = vunpack.c.l.b16 %v213
    %v1355 = vunpack.c.l.b16 %v214
    %v1356 = vunpack.c.l.b16 %v215
    %v1357 = vunpack.c.l.b16 %v216
    %v1358 = vunpack.c.l.b16 %v217
    %v1359 = vunpack.c.l.b16 %v218
    %v1360 = vunpack.c.l.b16 %v219
    %v1361 = vunpack.c.l.b16 %v220
    %v1362 = vunpack.c.l.b16 %v221
    %v1363 = vunpack.c.l.b16 %v222
    %v1364 = vunpack.c.l.b16 %v223
    %v1365 = vunpack.c.l.b16 %v224
    %v1366 = vunpack.c.l.b16 %v225
    %v1367 = vunpack.c.l.b16 %v226
    %v1368 = vunpack.c.l.b16 %v227
    %v1369 = vunpack.c.l.b16 %v228
    %v1370 = vunpack.c.l.b16 %v229
    %v1371 = vunpack.c.l.b16 %v230
    %v1372 = vunpack.c.l.b16 %v231
    %v1373 = vunpack.c.l.b16 %v232
    %v1374 = vunpack.c.l.b16 %v233
    %v1375 = vunpack.c.l.b16 %v234
    %v1376 = vunpack.c.l.b16 %v235
    %v1377 = vunpack.c.l.b16 %v236
    %v1378 = vunpack.c.l.b16 %v237
    %v1379 = vunpack.c.l.b16 %v238
    %v1380 = vunpack.c.l.b16 %v239
    %v1381 = vunpack.c.l.b16 %v240
    %v1382 = vunpack.c.l.b16 %v241
    %v1383 = vunpack.c.l.b16 %v242
    %v1384 = vunpack.c.l.b16 %v243
    %v1385 = vunpack.c.l.b16 %v244
    %v1386 = vunpack.c.l.b16 %v245
    %v1387 = vunpack.c.l.b16 %v246
    %v1388 = vunpack.c.l.b16 %v247
    %v1389 = vunpack.c.l.b16 %v248
    %v1390 = vunpack.c.l.b16 %v249
    %v1391 = vunpack.c.l.b16 %v250
    %v1392 = vunpack.c.l.b16 %v251
    %v1393 = vunpack.c.l.b16 %v252
    %v1394 = vunpack.c.l.b16 %v253
    %v1395 = vunpack.c.l.b16 %v254
    %v1396 = vunpack.c.l.b16 %v255
    %v1397 = vunpack.c.l.b16 %v256
    %v1398 = vunpack.c.l.b16 %v257
    %v1399 = vunpack.c.l.b16 %v258
    %v1400 = vunpack.c.l.b16 %v259
    %v1401 = vunpack.c.l.b16 %v260
    %v1402 = vunpack.c.l.b16 %v261
    %v1403 = vunpack.c.l.b16 %v262
    %v1404 = vunpack.c.l.b16 %v263
    %v1405 = vunpack.c.l.b16 %v264
    %v1406 = vunpack.c.l.b16 %v265
    %v1407 = vunpack.c.l.b16 %v266
    %v1408 = vunpack.c.l.b16 %v267
    %v1409 = vunpack.c.l.b16 %v268
    %v1410 = vunpack.c.l.b16 %v269
    %v1411 = vunpack.c.l.b16 %v270
    %v1412 = vunpack.c.l.b16 %v271
    %v1413 = vunpack.c.l.b16 %v272
    %v1414 = vunpack.c.l.b16 %v273
    %v1415 = vunpack.c.l.b16 %v274
    %v1416 = vunpack.c.l.b16 %v275
    %v1417 = vunpack.c.l.b16 %v276
    %v1418 = vunpack.c.l.b16 %v277
    %v1419 = vunpack.c.l.b16 %v278
    %v1420 = vunpack.c.l.b16 %v279
    %v1421 = vunpack.c.l.b16 %v280
    %v1422 = vunpack.c.l.b16 %v281
    %v1423 = vunpack.c.l.b16 %v282
    %v1424 = vunpack.c.l.b16 %v283
    %v1425 = vunpack.c.l.b16 %v284
    %v1426 = vunpack.c.l.b16 %v285
    %v1427 = vunpack.c.l.b16 %v286
    %v1428 = vunpack.c.l.b16 %v287
    %v1429 = vunpack.c.l.b16 %v288
    %v1430 = vunpack.c.l.b16 %v289
    %v1431 = vunpack.c.l.b16 %v290
    %v1432 = vunpack.c.l.b16 %v291
    %v1433 = vunpack.c.l.b16 %v292
    %v1434 = vunpack.c.l.b16 %v293
    %v1435 = vunpack.c.l.b16 %v294
    %v1436 = vunpack.c.l.b16 %v295
    %v1437 = vunpack.c.l.b16 %v296
    %v1438 = vunpack.c.l.b16 %v297
    %v1439 = vunpack.c.l.b16 %v298
    %v1440 = vunpack.c.l.b16 %v299
    %v1441 = vunpack.c.l.b16 %v300
    %v1442 = vunpack.c.l.b16 %v301
    %v1443 = vunpack.c.l.b16 %v302
    %v1444 = vunpack.c.l.b16 %v303
    %v1445 = vunpack.c.l.b16 %v304
    %v1446 = vunpack.c.l.b16 %v305
    %v1447 = vunpack.c.l.b16 %v306
    %v1448 = vunpack.c.l.b16 %v307
    %v1449 = vunpack.c.l.b16 %v308
    %v1450 = vunpack.c.l.b16 %v309
    %v1451 = vunpack.c.l.b16 %v310
    %v1452 = vunpack.c.l.b16 %v311
    %v1453 = vunpack.c.l.b16 %v312
    %v1454 = vunpack.c.l.b16 %v313
    %v1455 = vunpack.c.l.b16 %v314
    %v1456 = vunpack.c.l.b16 %v315
    %v1457 = vunpack.c.l.b16 %v316
    %v1458 = vunpack.c.l.b16 %v317
    %v1459 = vunpack.c.l.b16 %v318
    %v1460 = vunpack.c.l.b16 %v319
    %v1461 = vunpack.c.l.b16 %v320
    %v1462 = vunpack.c.l.b16 %v321
    %v1463 = vunpack.c.l.b16 %v322
    %v1464 = vunpack.c.l.b16 %v323
    %v1465 = vunpack.c.l.b16 %v324
    %v1466 = vunpack.c.l.b16 %v325
    %v1467 = vunpack.c.l.b16 %v326
    %v1468 = vunpack.c.l.b16 %v327
    %v1469 = vunpack.c.l.b16 %v328
    %v1470 = vunpack.c.l.b16 %v329
    %v1471 = vunpack.c.l.b16 %v330
    %v1472 = vunpack.c.l.b16 %v331
    %v1473 = vunpack.c.l.b16 %v332
    %v1474 = vunpack.c.l.b16 %v333
    %v1475 = vunpack.c.l.b16 %v334
    %v1476 = vunpack.c.l.b16 %v335
    %v1477 = vunpack.c.l.b16 %v336
    %v1478 = vunpack.c.l.b16 %v337
    %v1479 = vunpack.c.l.b16 %v338
    %v1480 = vunpack.c.l.b16 %v339
    %v1481 = vunpack.c.l.b16 %v340
    %v1482 = vunpack.c.l.b16 %v341
    %v1483 = vunpack.c.l.b16 %v342
    %v1484 = vunpack.c.l.b16 %v343
    %v1485 = vunpack.c.l.b16 %v344
    %v1486 = vunpack.c.l.b16 %v345
    %v1487 = vunpack.c.l.b16 %v346
    %v1488 = vunpack.c.l.b16 %v347
    %v1489 = vunpack.c.l.b16 %v348
    %v1490 = vunpack.c.l.b16 %v349
    %v1491 = vunpack.c.l.b16 %v350
    %v1492 = vunpack.c.l.b16 %v351
    %v1493 = vunpack.c.l.b16 %v352
    %v1494 = vunpack.c.l.b16 %v353
    %v1495 = vunpack.c.l.b16 %v354
    %v1496 = vunpack.c.l.b16 %v355
    %v1497 = vunpack.c.l.b16 %v356
    %v1498 = vunpack.c.l.b16 %v357
    %v1499 = vunpack.c.l.b16 %v358
    %v1500 = vunpack.c.l.b16 %v359
    %v1501 = vunpack.c.l.b16 %v360
    %v1502 = vunpack.c.l.b16 %v361
    %v1503 = vunpack.c.l.b16 %v362
    %v1504 = vunpack.c.l.b16 %v363
    %v1505 = vunpack.c.l.b16 %v364
    %v1506 = vunpack.c.l.b16 %v365
    %v1507 = vunpack.c.l.b16 %v366
    %v1508 = vunpack.c.l.b16 %v367
    %v1509 = vunpack.c.l.b16 %v368
    %v1510 = vunpack.c.l.b16 %v369
    %v1511 = vunpack.c.l.b16 %v370
    %v1512 = vunpack.c.l.b16 %v371
    %v1513 = vunpack.c.l.b16 %v372
    %v1514 = vunpack.c.l.b16 %v373
    %v1515 = vunpack.c.l.b16 %v374
    %v1516 = vunpack.c.l.b16 %v375
    %v1517 = vunpack.c.l.b16 %v376
    %v1518 = vunpack.c.l.b16 %v377
    %v1519 = vunpack.c.l.b16 %v378
    %v1520 = vunpack.c.l.b16 %v379
    %v1521 = vunpack.c.l.b16 %v380
    %v1522 = vunpack.c.l.b16 %v381
    %v1523 = vunpack.c.l.b16 %v382
    %v1524 = vunpack.c.l.b16 %v383
    %v1525 = vunpack.c.l.b16 %v384
    %v1526 = vunpack.c.l.b16 %v385
    %v1527 = vunpack.c.l.b16 %v386
    %v1528 = vunpack.c.l.b16 %v387
    %v1529 = vunpack.c.l.b16 %v388
    %v1530 = vunpack.c.l.b16 %v389
    %v1531 = vunpack.c.l.b16 %v390
    %v1532 = vunpack.c.l.b16 %v391
    %v1533 = vunpack.c.l.b16 %v392
    %v1534 = vunpack.c.l.b16 %v393
    %v1535 = vunpack.c.l.b16 %v394
    %v1536 = vunpack.c.l.b16 %v395
    %v1537 = vunpack.c.l.b16 %v396
    %v1538 = vunpack.c.l.b16 %v397
    %v1539 = vunpack.c.l.b16 %v398
    %v1540 = vunpack.c.l.b16 %v399
    %v1541 = vunpack.c.l.b16 %v400
    %v1542 = vunpack.c.l.b16 %v401
    %v1543 = vunpack.c.l.b16 %v402
    %v1544 = vunpack.c.l.b16 %v403
    %v1545 = vunpack.c.l.b16 %v404
    %v1546 = vunpack.c.l.b16 %v405
    %v1547 = vunpack.c.l.b16 %v406
    %v1548 = vunpack.c.l.b16 %v407
    %v1549 = vunpack.c.l.b16 %v408
    %v1550 = vunpack.c.l.b16 %v409
    %v1551 = vunpack.c.l.b16 %v410
    %v1552 = vunpack.c.l.b16 %v411
    %v1553 = vunpack.c.l.b16 %v412
    %v1554 = vunpack.c.l.b16 %v413
    %v1555 = vunpack.c.l.b16 %v414
    %v1556 = vunpack.c.l.b16 %v415
    %v1557 = vunpack.c.l.b16 %v416
    %v1558 = vunpack.c.l.b16 %v417
    %v1559 = vunpack.c.l.b16 %v418
    %v1560 = vunpack.c.l.b16 %v419
    %v1561 = vunpack.c.l.b16 %v420
    %v1562 = vunpack.c.l.b16 %v421
    %v1563 = vunpack.c.l.b16 %v422
    %v1564 = vunpack.c.l.b16 %v423
    %v1565 = vunpack.c.l.b16 %v424
    %v1566 = vunpack.c.l.b16 %v425
    %v1567 = vunpack.c.l.b16 %v426
    %v1568 = vunpack.c.l.b16 %v427
    %v1569 = vunpack.c.l.b16 %v428
    %v1570 = vunpack.c.l.b16 %v429
    %v1571 = vunpack.c.l.b16 %v430
    %v1572 = vunpack.c.l.b16 %v431
    %v1573 = vunpack.c.l.b16 %v432
    %v1574 = vunpack.c.l.b16 %v433
    %v1575 = vunpack.c.l.b16 %v434
    %v1576 = vunpack.c.l.b16 %v435
    %v1577 = vunpack.c.l.b16 %v436
    %v1578 = vunpack.c.l.b16 %v437
    %v1579 = vunpack.c.l.b16 %v438
    %v1580 = vunpack.c.l.b16 %v439
    %v1581 = vunpack.c.l.b16 %v440
    %v1582 = vunpack.c.l.b16 %v441
    %v1583 = vunpack.c.l.b16 %v442
    %v1584 = vunpack.c.l.b16 %v443
    %v1585 = vunpack.c.l.b16 %v444
    %v1586 = vunpack.c.l.b16 %v445
    %v1587 = vunpack.c.l.b16 %v446
    %v1588 = vunpack.c.l.b16 %v447
    %v1589 = vunpack.c.l.b16 %v448
    %v1590 = vunpack.c.l.b16 %v449
    %v1591 = vunpack.c.l.b16 %v450
    %v1592 = vunpack.c.l.b16 %v451
    %v1593 = vunpack.c.l.b16 %v452
    %v1594 = vunpack.c.l.b16 %v453
    %v1595 = vunpack.c.l.b16 %v454
    %v1596 = vunpack.c.l.b16 %v455
    %v1597 = vunpack.c.l.b16 %v456
    %v1598 = vunpack.c.l.b16 %v457
    %v1599 = vunpack.c.l.b16 %v458
    %v1600 = vunpack.c.l.b16 %v459
    %v1601 = vunpack.c.l.b16 %v460
    %v1602 = vunpack.c.l.b16 %v461
    %v1603 = vunpack.c.l.b16 %v462
    %v1604 = vunpack.c.l.b16 %v463
    %v1605 = vunpack.c.l.b16 %v464
    %v1606 = vunpack.c.l.b16 %v465
    %v1607 = vunpack.c.l.b16 %v466
    %v1608 = vunpack.c.l.b16 %v467
    %v1609 = vunpack.c.l.b16 %v468
    %v1610 = vunpack.c.l.b16 %v469
    %v1611 = vunpack.c.l.b16 %v470
    %v1612 = vunpack.c.l.b16 %v471
    %v1613 = vunpack.c.l.b16 %v472
    %v1614 = vunpack.c.l.b16 %v473
    %v1615 = vunpack.c.l.b16 %v474
    %v1616 = vunpack.c.l.b16 %v475
    %v1617 = vunpack.c.l.b16 %v476
    %v1618 = vunpack.c.l.b16 %v477
    %v1619 = vunpack.c.l.b16 %v478
    %v1620 = vunpack.c.l.b16 %v479
    %v1621 = vunpack.c.l.b16 %v480
    %v1622 = vunpack.c.l.b16 %v481
    %v1623 = vunpack.c.l.b16 %v482
    %v1624 = vunpack.c.l.b16 %v483
    %v1625 = vunpack.c.l.b16 %v484
    %v1626 = vunpack.c.l.b16 %v485
    %v1627 = vunpack.c.l.b16 %v486
    %v1628 = vunpack.c.l.b16 %v487
    %v1629 = vunpack.c.l.b16 %v488
    %v1630 = vunpack.c.l.b16 %v489
    %v1631 = vunpack.c.l.b16 %v490
    %v1632 = vunpack.c.l.b16 %v491
    %v1633 = vunpack.c.l.b16 %v492
    %v1634 = vunpack.c.l.b16 %v493
    %v1635 = vunpack.c.l.b16 %v494
    %v1636 = vunpack.c.l.b16 %v495
    %v1637 = vunpack.c.l.b16 %v496
    %v1638 = vunpack.c.l.b16 %v497
    %v1639 = vunpack.c.l.b16 %v498
    %v1640 = vunpack.c.l.b16 %v499
    %v1641 = vunpack.c.l.b16 %v500
    %v1642 = vunpack.c.l.b16 %v501
    %v1643 = vunpack.c.l.b16 %v502
    %v1644 = vunpack.c.l.b16 %v503
    %v1645 = vunpack.c.l.b16 %v504
    %v1646 = vunpack.c.l.b16 %v505
    %v1647 = vunpack.c.l.b16 %v506
    %v1648 = vunpack.c.l.b16 %v507
    %v1649 = vunpack.c.l.b16 %v508
    %v1650 = vunpack.c.l.b16 %v509
    %v1651 = vunpack.c.l.b16 %v510
    %v1652 = vunpack.c.l.b16 %v511
    %v1653 = vunpack.c.l.b16 %v512
    %v1654 = vunpack.c.l.b16 %v513
    %v1655 = vunpack.c.l.b16 %v514
    %v1656 = vunpack.c.l.b16 %v515
    %v1657 = vunpack.c.l.b16 %v516
    %v1658 = vunpack.c.l.b16 %v517
    %v1659 = vunpack.c.l.b16 %v518
    %v1660 = vunpack.c.l.b16 %v519
    %v1661 = vunpack.c.l.b16 %v520
    %v1662 = vunpack.c.l.b16 %v521
    %v1663 = vunpack.c.l.b16 %v522
    %v1664 = vunpack.c.l.b16 %v523
    %v1665 = vunpack.c.l.b16 %v524
    %v1666 = vunpack.c.l.b16 %v525
    %v1667 = vunpack.c.l.b16 %v526
    %v1668 = vunpack.c.l.b16 %v527
    %v1669 = vunpack.c.l.b16 %v528
    %v1670 = vunpack.c.l.b16 %v529
    %v1671 = vunpack.c.l.b16 %v530
    %v1672 = vunpack.c.l.b16 %v531
    %v1673 = vunpack.c.l.b16 %v532
    %v1674 = vunpack.c.l.b16 %v533
    %v1675 = vunpack.c.l.b16 %v534
    %v1676 = vunpack.c.l.b16 %v535
    %v1677 = vunpack.c.l.b16 %v536
    %v1678 = vunpack.c.l.b16 %v537
    %v1679 = vunpack.c.l.b16 %v538
    %v1680 = vunpack.c.l.b16 %v539
    %v1681 = vunpack.c.l.b16 %v540
    %v1682 = vunpack.c.l.b16 %v541
    %v1683 = vunpack.c.l.b16 %v542
    %v1684 = vunpack.c.l.b16 %v543
    %v1685 = vunpack.c.l.b16 %v544
    %v1686 = vunpack.c.l.b16 %v545
    %v1687 = vunpack.c.l.b16 %v546
    %v1688 = vunpack.c.l.b16 %v547
    %v1689 = vunpack.c.l.b16 %v548
    %v1690 = vunpack.c.l.b16 %v549
    %v1691 = vunpack.c.l.b16 %v550
    %v1692 = vunpack.c.l.b16 %v551
    %v1693 = vunpack.c.l.b16 %v552
    %v1694 = vunpack.c.l.b16 %v553
    %v1695 = vunpack.c.l.b16 %v554
    %v1696 = vunpack.c.l.b16 %v555
    %v1697 = vunpack.c.l.b16 %v556
    %v1698 = vunpack.c.l.b16 %v557
    %v1699 = vunpack.c.l.b16 %v558
    %v1700 = vunpack.c.l.b16 %v559
    %v1701 = vunpack.c.l.b16 %v560
    %v1702 = vunpack.c.l.b16 %v561
    %v1703 = vunpack.c.l.b16 %v562
    %v1704 = vunpack.c.l.b16 %v563
    %v1705 = vpack.c.b16 %v1194, %v1193
    %v1706 = vpack.c.b16 %v1196, %v1195
    %v1707 = vpack.c.b16 %v1198, %v1197
    %v1708 = vpack.c.b16 %v1200, %v1199
    %v1709 = vpack.c.b16 %v1202, %v1201
    %v1710 = vpack.c.b16 %v1204, %v1203
    %v1711 = vpack.c.b16 %v1206, %v1205
    %v1712 = vpack.c.b16 %v1208, %v1207
    %v1713 = vpack.c.b16 %v1210, %v1209
    %v1714 = vpack.c.b16 %v1212, %v1211
    %v1715 = vpack.c.b16 %v1214, %v1213
    %v1716 = vpack.c.b16 %v1216, %v1215
    %v1717 = vpack.c.b16 %v1218, %v1217
    %v1718 = vpack.c.b16 %v1220, %v1219
    %v1719 = vpack.c.b16 %v1222, %v1221
    %v1720 = vpack.c.b16 %v1224, %v1223
    %v1721 = vpack.c.b16 %v1226, %v1225
    %v1722 = vpack.c.b16 %v1228, %v1227
    %v1723 = vpack.c.b16 %v1230, %v1229
    %v1724 = vpack.c.b16 %v1232, %v1231
    %v1725 = vpack.c.b16 %v1234, %v1233
    %v1726 = vpack.c.b16 %v1236, %v1235
    %v1727 = vpack.c.b16 %v1238, %v1237
    %v1728 = vpack.c.b16 %v1240, %v1239
    %v1729 = vpack.c.b16 %v1242, %v1241
    %v1730 = vpack.c.b16 %v1244, %v1243
    %v1731 = vpack.c.b16 %v1246, %v1245
    %v1732 = vpack.c.b16 %v1248, %v1247
    %v1733 = vpack.c.b16 %v1250, %v1249
    %v1734 = vpack.c.b16 %v1252, %v1251
    %v1735 = vpack.c.b16 %v1254, %v1253
    %v1736 = vpack.c.b16 %v1256, %v1255
    %v1737 = vpack.c.b16 %v1258, %v1257
    %v1738 = vpack.c.b16 %v1260, %v1259
    %v1739 = vpack.c.b16 %v1262, %v1261
    %v1740 = vpack.c.b16 %v1264, %v1263
    %v1741 = vpack.c.b16 %v1266, %v1265
    %v1742 = vpack.c.b16 %v1268, %v1267
    %v1743 = vpack.c.b16 %v1270, %v1269
    %v1744 = vpack.c.b16 %v1272, %v1271
    %v1745 = vpack.c.b16 %v1274, %v1273
    %v1746 = vpack.c.b16 %v1276, %v1275
    %v1747 = vpack.c.b16 %v1278, %v1277
    %v1748 = vpack.c.b16 %v1280, %v1279
    %v1749 = vpack.c.b16 %v1282, %v1281
    %v1750 = vpack.c.b16 %v1284, %v1283
    %v1751 = vpack.c.b16 %v1286, %v1285
    %v1752 = vpack.c.b16 %v1288, %v1287
    %v1753 = vpack.c.b16 %v1290, %v1289
    %v1754 = vpack.c.b16 %v1292, %v1291
    %v1755 = vpack.c.b16 %v1294, %v1293
    %v1756 = vpack.c.b16 %v1296, %v1295
    %v1757 = vpack.c.b16 %v1298, %v1297
    %v1758 = vpack.c.b16 %v1300, %v1299
    %v1759 = vpack.c.b16 %v1302, %v1301
    %v1760 = vpack.c.b16 %v1304, %v1303
    %v1761 = vpack.c.b16 %v1306, %v1305
    %v1762 = vpack.c.b16 %v1308, %v1307
    %v1763 = vpack.c.b16 %v1310, %v1309
    %v1764 = vpack.c.b16 %v1312, %v1311
    %v1765 = vpack.c.b16 %v1314, %v1313
    %v1766 = vpack.c.b16 %v1316, %v1315
    %v1767 = vpack.c.b16 %v1318, %v1317
    %v1768 = vpack.c.b16 %v1320, %v1319
    %v1769 = vpack.c.b16 %v1322, %v1321
    %v1770 = vpack.c.b16 %v1324, %v1323
    %v1771 = vpack.c.b16 %v1326, %v1325
    %v1772 = vpack.c.b16 %v1328, %v1327
    %v1773 = vpack.c.b16 %v1330, %v1329
    %v1774 = vpack.c.b16 %v1332, %v1331
    %v1775 = vpack.c.b16 %v1334, %v1333
    %v1776 = vpack.c.b16 %v1336, %v1335
    %v1777 = vpack.c.b16 %v1338, %v1337
    %v1778 = vpack.c.b16 %v1340, %v1339
    %v1779 = vpack.c.b16 %v1342, %v1341
    %v1780 = vpack.c.b16 %v1344, %v1343
    %v1781 = vpack.c.b16 %v1346, %v1345
    %v1782 = vpack.c.b16 %v1348, %v1347
    %v1783 = vpack.c.b16 %v1350, %v1349
    %v1784 = vpack.c.b16 %v1352, %v1351
    %v1785 = vpack.c.b16 %v1354, %v1353
    %v1786 = vpack.c.b16 %v1356, %v1355
    %v1787 = vpack.c.b16 %v1358, %v1357
    %v1788 = vpack.c.b16 %v1360, %v1359
    %v1789 = vpack.c.b16 %v1362, %v1361
    %v1790 = vpack.c.b16 %v1364, %v1363
    %v1791 = vpack.c.b16 %v1366, %v1365
    %v1792 = vpack.c.b16 %v1368, %v1367
    %v1793 = vpack.c.b16 %v1370, %v1369
    %v1794 = vpack.c.b16 %v1372, %v1371
    %v1795 = vpack.c.b16 %v1374, %v1373
    %v1796 = vpack.c.b16 %v1376, %v1375
    %v1797 = vpack.c.b16 %v1378, %v1377
    %v1798 = vpack.c.b16 %v1380, %v1379
    %v1799 = vpack.c.b16 %v1382, %v1381
    %v1800 = vpack.c.b16 %v1384, %v1383
    %v1801 = vpack.c.b16 %v1386, %v1385
    %v1802 = vpack.c.b16 %v1388, %v1387
    %v1803 = vpack.c.b16 %v1390, %v1389
    %v1804 = vpack.c.b16 %v1392, %v1391
    %v1805 = vpack.c.b16 %v1394, %v1393
    %v1806 = vpack.c.b16 %v1396, %v1395
    %v1807 = vpack.c.b16 %v1398, %v1397
    %v1808 = vpack.c.b16 %v1400, %v1399
    %v1809 = vpack.c.b16 %v1402, %v1401
    %v1810 = vpack.c.b16 %v1404, %v1403
    %v1811 = vpack.c.b16 %v1406, %v1405
    %v1812 = vpack.c.b16 %v1408, %v1407
    %v1813 = vpack.c.b16 %v1410, %v1409
    %v1814 = vpack.c.b16 %v1412, %v1411
    %v1815 = vpack.c.b16 %v1414, %v1413
    %v1816 = vpack.c.b16 %v1416, %v1415
    %v1817 = vpack.c.b16 %v1418, %v1417
    %v1818 = vpack.c.b16 %v1420, %v1419
    %v1819 = vpack.c.b16 %v1422, %v1421
    %v1820 = vpack.c.b16 %v1424, %v1423
    %v1821 = vpack.c.b16 %v1426, %v1425
    %v1822 = vpack.c.b16 %v1428, %v1427
    %v1823 = vpack.c.b16 %v1430, %v1429
    %v1824 = vpack.c.b16 %v1432, %v1431
    %v1825 = vpack.c.b16 %v1434, %v1433
    %v1826 = vpack.c.b16 %v1436, %v1435
    %v1827 = vpack.c.b16 %v1438, %v1437
    %v1828 = vpack.c.b16 %v1440, %v1439
    %v1829 = vpack.c.b16 %v1442, %v1441
    %v1830 = vpack.c.b16 %v1444, %v1443
    %v1831 = vpack.c.b16 %v1446, %v1445
    %v1832 = vpack.c.b16 %v1448, %v1447
    %v1833 = vpack.c.b16 %v1450, %v1449
    %v1834 = vpack.c.b16 %v1452, %v1451
    %v1835 = vpack.c.b16 %v1454, %v1453
    %v1836 = vpack.c.b16 %v1456, %v1455
    %v1837 = vpack.c.b16 %v1458, %v1457
    %v1838 = vpack.c.b16 %v1460, %v1459
    %v1839 = vpack.c.b16 %v1462, %v1461
    %v1840 = vpack.c.b16 %v1464, %v1463
    %v1841 = vpack.c.b16 %v1466, %v1465
    %v1842 = vpack.c.b16 %v1468, %v1467
    %v1843 = vpack.c.b16 %v1470, %v1469
    %v1844 = vpack.c.b16 %v1472, %v1471
    %v1845 = vpack.c.b16 %v1474, %v1473
    %v1846 = vpack.c.b16 %v1476, %v1475
    %v1847 = vpack.c.b16 %v1478, %v1477
    %v1848 = vpack.c.b16 %v1480, %v1479
    %v1849 = vpack.c.b16 %v1482, %v1481
    %v1850 = vpack.c.b16 %v1484, %v1483
    %v1851 = vpack.c.b16 %v1486, %v1485
    %v1852 = vpack.c.b16 %v1488, %v1487
    %v1853 = vpack.c.b16 %v1490, %v1489
    %v1854 = vpack.c.b16 %v1492, %v1491
    %v1855 = vpack.c.b16 %v1494, %v1493
    %v1856 = vpack.c.b16 %v1496, %v1495
    %v1857 = vpack.c.b16 %v1498, %v1497
    %v1858 = vpack.c.b16 %v1500, %v1499
    %v1859 = vpack.c.b16 %v1502, %v1501
    %v1860 = vpack.c.b16 %v1504, %v1503
    %v1861 = vpack.c.b16 %v1506, %v1505
    %v1862 = vpack.c.b16 %v1508, %v1507
    %v1863 = vpack.c.b16 %v1510, %v1509
    %v1864 = vpack.c.b16 %v1512, %v1511
    %v1865 = vpack.c.b16 %v1514, %v1513
    %v1866 = vpack.c.b16 %v1516, %v1515
    %v1867 = vpack.c.b16 %v1518, %v1517
    %v1868 = vpack.c.b16 %v1520, %v1519
    %v1869 = vpack.c.b16 %v1522, %v1521
    %v1870 = vpack.c.b16 %v1524, %v1523
    %v1871 = vpack.c.b16 %v1526, %v1525
    %v1872 = vpack.c.b16 %v1528, %v1527
    %v1873 = vpack.c.b16 %v1530, %v1529
    %v1874 = vpack.c.b16 %v1532, %v1531
    %v1875 = vpack.c.b16 %v1534, %v1533
    %v1876 = vpack.c.b16 %v1536, %v1535
    %v1877 = vpack.c.b16 %v1538, %v1537
    %v1878 = vpack.c.b16 %v1540, %v1539
    %v1879 = vpack.c.b16 %v1542, %v1541
    %v1880 = vpack.c.b16 %v1544, %v1543
    %v1881 = vpack.c.b16 %v1546, %v1545
    %v1882 = vpack.c.b16 %v1548, %v1547
    %v1883 = vpack.c.b16 %v1550, %v1549
    %v1884 = vpack.c.b16 %v1552, %v1551
    %v1885 = vpack.c.b16 %v1554, %v1553
    %v1886 = vpack.c.b16 %v1556, %v1555
    %v1887 = vpack.c.b16 %v1558, %v1557
    %v1888 = vpack.c.b16 %v1560, %v1559
    %v1889 = vpack.c.b16 %v1562, %v1561
    %v1890 = vpack.c.b16 %v1564, %v1563
    %v1891 = vpack.c.b16 %v1566, %v1565
    %v1892 = vpack.c.b16 %v1568, %v1567
    %v1893 = vpack.c.b16 %v1570, %v1569
    %v1894 = vpack.c.b16 %v1572, %v1571
    %v1895 = vpack.c.b16 %v1574, %v1573
    %v1896 = vpack.c.b16 %v1576, %v1575
    %v1897 = vpack.c.b16 %v1578, %v1577
    %v1898 = vpack.c.b16 %v1580, %v1579
    %v1899 = vpack.c.b16 %v1582, %v1581
    %v1900 = vpack.c.b16 %v1584, %v1583
    %v1901 = vpack.c.b16 %v1586, %v1585
    %v1902 = vpack.c.b16 %v1588, %v1587
    %v1903 = vpack.c.b16 %v1590, %v1589
    %v1904 = vpack.c.b16 %v1592, %v1591
    %v1905 = vpack.c.b16 %v1594, %v1593
    %v1906 = vpack.c.b16 %v1596, %v1595
    %v1907 = vpack.c.b16 %v1598, %v1597
    %v1908 = vpack.c.b16 %v1600, %v1599
    %v1909 = vpack.c.b16 %v1602, %v1601
    %v1910 = vpack.c.b16 %v1604, %v1603
    %v1911 = vpack.c.b16 %v1606, %v1605
    %v1912 = vpack.c.b16 %v1608, %v1607
    %v1913 = vpack.c.b16 %v1610, %v1609
    %v1914 = vpack.c.b16 %v1612, %v1611
    %v1915 = vpack.c.b16 %v1614, %v1613
    %v1916 = vpack.c.b16 %v1616, %v1615
    %v1917 = vpack.c.b16 %v1618, %v1617
    %v1918 = vpack.c.b16 %v1620, %v1619
    %v1919 = vpack.c.b16 %v1622, %v1621
    %v1920 = vpack.c.b16 %v1624, %v1623
    %v1921 = vpack.c.b16 %v1626, %v1625
    %v1922 = vpack.c.b16 %v1628, %v1627
    %v1923 = vpack.c.b16 %v1630, %v1629
    %v1924 = vpack.c.b16 %v1632, %v1631
    %v1925 = vpack.c.b16 %v1634, %v1633
    %v1926 = vpack.c.b16 %v1636, %v1635
    %v1927 = vpack.c.b16 %v1638, %v1637
    %v1928 = vpack.c.b16 %v1640, %v1639
    %v1929 = vpack.c.b16 %v1642, %v1641
    %v1930 = vpack.c.b16 %v1644, %v1643
    %v1931 = vpack.c.b16 %v1646, %v1645
    %v1932 = vpack.c.b16 %v1648, %v1647
    %v1933 = vpack.c.b16 %v1650, %v1649
    %v1934 = vpack.c.b16 %v1652, %v1651
    %v1935 = vpack.c.b16 %v1654, %v1653
    %v1936 = vpack.c.b16 %v1656, %v1655
    %v1937 = vpack.c.b16 %v1658, %v1657
    %v1938 = vpack.c.b16 %v1660, %v1659
    %v1939 = vpack.c.b16 %v1662, %v1661
    %v1940 = vpack.c.b16 %v1664, %v1663
    %v1941 = vpack.c.b16 %v1666, %v1665
    %v1942 = vpack.c.b16 %v1668, %v1667
    %v1943 = vpack.c.b16 %v1670, %v1669
    %v1944 = vpack.c.b16 %v1672, %v1671
    %v1945 = vpack.c.b16 %v1674, %v1673
    %v1946 = vpack.c.b16 %v1676, %v1675
    %v1947 = vpack.c.b16 %v1678, %v1677
    %v1948 = vpack.c.b16 %v1680, %v1679
    %v1949 = vpack.c.b16 %v1682, %v1681
    %v1950 = vpack.c.b16 %v1684, %v1683
    %v1951 = vpack.c.b16 %v1686, %v1685
    %v1952 = vpack.c.b16 %v1688, %v1687
    %v1953 = vpack.c.b16 %v1690, %v1689
    %v1954 = vpack.c.b16 %v1692, %v1691
    %v1955 = vpack.c.b16 %v1694, %v1693
    %v1956 = vpack.c.b16 %v1696, %v1695
    %v1957 = vpack.c.b16 %v1698, %v1697
    %v1958 = vpack.c.b16 %v1700, %v1699
    %v1959 = vpack.c.b16 %v1702, %v1701
    %v1960 = vpack.c.b16 %v1704, %v1703
    %2217 = vmatprep.subr.bf16.mxu0 0
    %2218 = vmatpush1.bf16.msra.mxu0 %v1712
    %2219 = vmatprep.subr.bf16.mxu0 0
    %2220 = vmatpush1.bf16.msra.mxu0 %v1711
    %2221 = vmatprep.subr.bf16.mxu0 0
    %2222 = vmatpush1.bf16.msra.mxu0 %v1710
    %2223 = vmatprep.subr.bf16.mxu0 0
    %2224 = vmatpush1.bf16.msra.mxu0 %v1709
    %2225 = vmatprep.subr.bf16.mxu0 0
    %2226 = vmatpush1.bf16.msra.mxu0 %v1708
    %2227 = vmatprep.subr.bf16.mxu0 0
    %2228 = vmatpush1.bf16.msra.mxu0 %v1707
    %2229 = vmatprep.subr.bf16.mxu0 0
    %2230 = vmatpush1.bf16.msra.mxu0 %v1706
    %2231 = vmatprep.subr.bf16.mxu0 0
    %2232 = vmatpush1.bf16.msra.mxu0 %v1705
    %2233 = vmatprep.subr.bf16.mxu0 0
    %2234 = vmatpush2.bf16.msra.mxu0 %v1720
    %2235 = vmatprep.subr.bf16.mxu0 0
    %2236 = vmatpush2.bf16.msra.mxu0 %v1719
    %2237 = vmatprep.subr.bf16.mxu0 0
    %2238 = vmatpush2.bf16.msra.mxu0 %v1718
    %2239 = vmatprep.subr.bf16.mxu0 0
    %2240 = vmatpush2.bf16.msra.mxu0 %v1717
    %2241 = vmatprep.subr.bf16.mxu0 0
    %2242 = vmatpush2.bf16.msra.mxu0 %v1716
    %2243 = vmatprep.subr.bf16.mxu0 0
    %2244 = vmatpush2.bf16.msra.mxu0 %v1715
    %2245 = vmatprep.subr.bf16.mxu0 0
    %2246 = vmatpush2.bf16.msra.mxu0 %v1714
    %2247 = vmatprep.subr.bf16.mxu0 0
    %2248 = vmatpush2.bf16.msra.mxu0 %v1713
    %2249 = vmatprep.mubr.bf16.mxu0 %v618
    %2250 = vmatmul.mubr.bf16.gmra.mxu0 %v617
    %v2251 = vpop.f32.mrf.mxu0
    %v2252 = vadd.f32 %v568, %v2251
    %v2253 = vpop.f32.mrf.mxu0
    %v2254 = vpop.f32.mrf.mxu0
    %v2255 = vpop.f32.mrf.mxu0
    %2256 = vdwg.mxu0
    %2257 = vmatprep.subr.bf16.mxu0 0
    %2258 = vmatpush1.bf16.msra.mxu0 %v1728
    %2259 = vmatprep.subr.bf16.mxu0 0
    %2260 = vmatpush1.bf16.msra.mxu0 %v1727
    %2261 = vmatprep.subr.bf16.mxu0 0
    %2262 = vmatpush1.bf16.msra.mxu0 %v1726
    %2263 = vmatprep.subr.bf16.mxu0 0
    %2264 = vmatpush1.bf16.msra.mxu0 %v1725
    %2265 = vmatprep.subr.bf16.mxu0 0
    %2266 = vmatpush1.bf16.msra.mxu0 %v1724
    %2267 = vmatprep.subr.bf16.mxu0 0
    %2268 = vmatpush1.bf16.msra.mxu0 %v1723
    %2269 = vmatprep.subr.bf16.mxu0 0
    %2270 = vmatpush1.bf16.msra.mxu0 %v1722
    %2271 = vmatprep.subr.bf16.mxu0 0
    %2272 = vmatpush1.bf16.msra.mxu0 %v1721
    %2273 = vmatprep.subr.bf16.mxu0 0
    %2274 = vmatpush2.bf16.msra.mxu0 %v1736
    %2275 = vmatprep.subr.bf16.mxu0 0
    %2276 = vmatpush2.bf16.msra.mxu0 %v1735
    %2277 = vmatprep.subr.bf16.mxu0 0
    %2278 = vmatpush2.bf16.msra.mxu0 %v1734
    %2279 = vmatprep.subr.bf16.mxu0 0
    %2280 = vmatpush2.bf16.msra.mxu0 %v1733
    %2281 = vmatprep.subr.bf16.mxu0 0
    %2282 = vmatpush2.bf16.msra.mxu0 %v1732
    %2283 = vmatprep.subr.bf16.mxu0 0
    %2284 = vmatpush2.bf16.msra.mxu0 %v1731
    %2285 = vmatprep.subr.bf16.mxu0 0
    %2286 = vmatpush2.bf16.msra.mxu0 %v1730
    %2287 = vmatprep.subr.bf16.mxu0 0
    %2288 = vmatpush2.bf16.msra.mxu0 %v1729
    %2289 = vmatprep.mubr.bf16.mxu0 %v620
    %2290 = vmatmul.mubr.bf16.gmra.mxu0 %v619
    %v2291 = vpop.f32.mrf.mxu0
    %v2292 = vadd.f32 %v2252, %v2291
    %v2293 = vpop.f32.mrf.mxu0
    %v2294 = vpop.f32.mrf.mxu0
    %v2295 = vpop.f32.mrf.mxu0
    %2296 = vdwg.mxu0
    %2297 = vmatprep.subr.bf16.mxu0 0
    %2298 = vmatpush1.bf16.msra.mxu0 %v1744
    %2299 = vmatprep.subr.bf16.mxu0 0
    %2300 = vmatpush1.bf16.msra.mxu0 %v1743
    %2301 = vmatprep.subr.bf16.mxu0 0
    %2302 = vmatpush1.bf16.msra.mxu0 %v1742
    %2303 = vmatprep.subr.bf16.mxu0 0
    %2304 = vmatpush1.bf16.msra.mxu0 %v1741
    %2305 = vmatprep.subr.bf16.mxu0 0
    %2306 = vmatpush1.bf16.msra.mxu0 %v1740
    %2307 = vmatprep.subr.bf16.mxu0 0
    %2308 = vmatpush1.bf16.msra.mxu0 %v1739
    %2309 = vmatprep.subr.bf16.mxu0 0
    %2310 = vmatpush1.bf16.msra.mxu0 %v1738
    %2311 = vmatprep.subr.bf16.mxu0 0
    %2312 = vmatpush1.bf16.msra.mxu0 %v1737
    %2313 = vmatprep.subr.bf16.mxu0 0
    %2314 = vmatpush2.bf16.msra.mxu0 %v1752
    %2315 = vmatprep.subr.bf16.mxu0 0
    %2316 = vmatpush2.bf16.msra.mxu0 %v1751
    %2317 = vmatprep.subr.bf16.mxu0 0
    %2318 = vmatpush2.bf16.msra.mxu0 %v1750
    %2319 = vmatprep.subr.bf16.mxu0 0
    %2320 = vmatpush2.bf16.msra.mxu0 %v1749
    %2321 = vmatprep.subr.bf16.mxu0 0
    %2322 = vmatpush2.bf16.msra.mxu0 %v1748
    %2323 = vmatprep.subr.bf16.mxu0 0
    %2324 = vmatpush2.bf16.msra.mxu0 %v1747
    %2325 = vmatprep.subr.bf16.mxu0 0
    %2326 = vmatpush2.bf16.msra.mxu0 %v1746
    %2327 = vmatprep.subr.bf16.mxu0 0
    %2328 = vmatpush2.bf16.msra.mxu0 %v1745
    %2329 = vmatprep.mubr.bf16.mxu0 %v622
    %2330 = vmatmul.mubr.bf16.gmra.mxu0 %v621
    %v2331 = vpop.f32.mrf.mxu0
    %v2332 = vadd.f32 %v2292, %v2331
    %v2333 = vpop.f32.mrf.mxu0
    %v2334 = vpop.f32.mrf.mxu0
    %v2335 = vpop.f32.mrf.mxu0
    %2336 = vdwg.mxu0
    %2337 = vmatprep.subr.bf16.mxu0 0
    %2338 = vmatpush1.bf16.msra.mxu0 %v1760
    %2339 = vmatprep.subr.bf16.mxu0 0
    %2340 = vmatpush1.bf16.msra.mxu0 %v1759
    %2341 = vmatprep.subr.bf16.mxu0 0
    %2342 = vmatpush1.bf16.msra.mxu0 %v1758
    %2343 = vmatprep.subr.bf16.mxu0 0
    %2344 = vmatpush1.bf16.msra.mxu0 %v1757
    %2345 = vmatprep.subr.bf16.mxu0 0
    %2346 = vmatpush1.bf16.msra.mxu0 %v1756
    %2347 = vmatprep.subr.bf16.mxu0 0
    %2348 = vmatpush1.bf16.msra.mxu0 %v1755
    %2349 = vmatprep.subr.bf16.mxu0 0
    %2350 = vmatpush1.bf16.msra.mxu0 %v1754
    %2351 = vmatprep.subr.bf16.mxu0 0
    %2352 = vmatpush1.bf16.msra.mxu0 %v1753
    %2353 = vmatprep.subr.bf16.mxu0 0
    %2354 = vmatpush2.bf16.msra.mxu0 %v1768
    %2355 = vmatprep.subr.bf16.mxu0 0
    %2356 = vmatpush2.bf16.msra.mxu0 %v1767
    %2357 = vmatprep.subr.bf16.mxu0 0
    %2358 = vmatpush2.bf16.msra.mxu0 %v1766
    %2359 = vmatprep.subr.bf16.mxu0 0
    %2360 = vmatpush2.bf16.msra.mxu0 %v1765
    %2361 = vmatprep.subr.bf16.mxu0 0
    %2362 = vmatpush2.bf16.msra.mxu0 %v1764
    %2363 = vmatprep.subr.bf16.mxu0 0
    %2364 = vmatpush2.bf16.msra.mxu0 %v1763
    %2365 = vmatprep.subr.bf16.mxu0 0
    %2366 = vmatpush2.bf16.msra.mxu0 %v1762
    %2367 = vmatprep.subr.bf16.mxu0 0
    %2368 = vmatpush2.bf16.msra.mxu0 %v1761
    %2369 = vmatprep.mubr.bf16.mxu0 %v624
    %2370 = vmatmul.mubr.bf16.gmra.mxu0 %v623
    %v2371 = vpop.f32.mrf.mxu0
    %v2372 = vadd.f32 %v2332, %v2371
    %v2373 = vpop.f32.mrf.mxu0
    %v2374 = vpop.f32.mrf.mxu0
    %v2375 = vpop.f32.mrf.mxu0
    %2376 = vdwg.mxu0
    %2377 = vmatprep.subr.bf16.mxu0 0
    %2378 = vmatpush1.bf16.msra.mxu0 %v1776
    %2379 = vmatprep.subr.bf16.mxu0 0
    %2380 = vmatpush1.bf16.msra.mxu0 %v1775
    %2381 = vmatprep.subr.bf16.mxu0 0
    %2382 = vmatpush1.bf16.msra.mxu0 %v1774
    %2383 = vmatprep.subr.bf16.mxu0 0
    %2384 = vmatpush1.bf16.msra.mxu0 %v1773
    %2385 = vmatprep.subr.bf16.mxu0 0
    %2386 = vmatpush1.bf16.msra.mxu0 %v1772
    %2387 = vmatprep.subr.bf16.mxu0 0
    %2388 = vmatpush1.bf16.msra.mxu0 %v1771
    %2389 = vmatprep.subr.bf16.mxu0 0
    %2390 = vmatpush1.bf16.msra.mxu0 %v1770
    %2391 = vmatprep.subr.bf16.mxu0 0
    %2392 = vmatpush1.bf16.msra.mxu0 %v1769
    %2393 = vmatprep.subr.bf16.mxu0 0
    %2394 = vmatpush2.bf16.msra.mxu0 %v1784
    %2395 = vmatprep.subr.bf16.mxu0 0
    %2396 = vmatpush2.bf16.msra.mxu0 %v1783
    %2397 = vmatprep.subr.bf16.mxu0 0
    %2398 = vmatpush2.bf16.msra.mxu0 %v1782
    %2399 = vmatprep.subr.bf16.mxu0 0
    %2400 = vmatpush2.bf16.msra.mxu0 %v1781
    %2401 = vmatprep.subr.bf16.mxu0 0
    %2402 = vmatpush2.bf16.msra.mxu0 %v1780
    %2403 = vmatprep.subr.bf16.mxu0 0
    %2404 = vmatpush2.bf16.msra.mxu0 %v1779
    %2405 = vmatprep.subr.bf16.mxu0 0
    %2406 = vmatpush2.bf16.msra.mxu0 %v1778
    %2407 = vmatprep.subr.bf16.mxu0 0
    %2408 = vmatpush2.bf16.msra.mxu0 %v1777
    %2409 = vmatprep.mubr.bf16.mxu0 %v626
    %2410 = vmatmul.mubr.bf16.gmra.mxu0 %v625
    %v2411 = vpop.f32.mrf.mxu0
    %v2412 = vadd.f32 %v2372, %v2411
    %v2413 = vpop.f32.mrf.mxu0
    %v2414 = vpop.f32.mrf.mxu0
    %v2415 = vpop.f32.mrf.mxu0
    %2416 = vdwg.mxu0
    %2417 = vmatprep.subr.bf16.mxu0 0
    %2418 = vmatpush1.bf16.msra.mxu0 %v1792
    %2419 = vmatprep.subr.bf16.mxu0 0
    %2420 = vmatpush1.bf16.msra.mxu0 %v1791
    %2421 = vmatprep.subr.bf16.mxu0 0
    %2422 = vmatpush1.bf16.msra.mxu0 %v1790
    %2423 = vmatprep.subr.bf16.mxu0 0
    %2424 = vmatpush1.bf16.msra.mxu0 %v1789
    %2425 = vmatprep.subr.bf16.mxu0 0
    %2426 = vmatpush1.bf16.msra.mxu0 %v1788
    %2427 = vmatprep.subr.bf16.mxu0 0
    %2428 = vmatpush1.bf16.msra.mxu0 %v1787
    %2429 = vmatprep.subr.bf16.mxu0 0
    %2430 = vmatpush1.bf16.msra.mxu0 %v1786
    %2431 = vmatprep.subr.bf16.mxu0 0
    %2432 = vmatpush1.bf16.msra.mxu0 %v1785
    %2433 = vmatprep.subr.bf16.mxu0 0
    %2434 = vmatpush2.bf16.msra.mxu0 %v1800
    %2435 = vmatprep.subr.bf16.mxu0 0
    %2436 = vmatpush2.bf16.msra.mxu0 %v1799
    %2437 = vmatprep.subr.bf16.mxu0 0
    %2438 = vmatpush2.bf16.msra.mxu0 %v1798
    %2439 = vmatprep.subr.bf16.mxu0 0
    %2440 = vmatpush2.bf16.msra.mxu0 %v1797
    %2441 = vmatprep.subr.bf16.mxu0 0
    %2442 = vmatpush2.bf16.msra.mxu0 %v1796
    %2443 = vmatprep.subr.bf16.mxu0 0
    %2444 = vmatpush2.bf16.msra.mxu0 %v1795
    %2445 = vmatprep.subr.bf16.mxu0 0
    %2446 = vmatpush2.bf16.msra.mxu0 %v1794
    %2447 = vmatprep.subr.bf16.mxu0 0
    %2448 = vmatpush2.bf16.msra.mxu0 %v1793
    %2449 = vmatprep.mubr.bf16.mxu0 %v628
    %2450 = vmatmul.mubr.bf16.gmra.mxu0 %v627
    %v2451 = vpop.f32.mrf.mxu0
    %v2452 = vadd.f32 %v2412, %v2451
    %v2453 = vpop.f32.mrf.mxu0
    %v2454 = vpop.f32.mrf.mxu0
    %v2455 = vpop.f32.mrf.mxu0
    %2456 = vdwg.mxu0
    %2457 = vmatprep.subr.bf16.mxu0 0
    %2458 = vmatpush1.bf16.msra.mxu0 %v1808
    %2459 = vmatprep.subr.bf16.mxu0 0
    %2460 = vmatpush1.bf16.msra.mxu0 %v1807
    %2461 = vmatprep.subr.bf16.mxu0 0
    %2462 = vmatpush1.bf16.msra.mxu0 %v1806
    %2463 = vmatprep.subr.bf16.mxu0 0
    %2464 = vmatpush1.bf16.msra.mxu0 %v1805
    %2465 = vmatprep.subr.bf16.mxu0 0
    %2466 = vmatpush1.bf16.msra.mxu0 %v1804
    %2467 = vmatprep.subr.bf16.mxu0 0
    %2468 = vmatpush1.bf16.msra.mxu0 %v1803
    %2469 = vmatprep.subr.bf16.mxu0 0
    %2470 = vmatpush1.bf16.msra.mxu0 %v1802
    %2471 = vmatprep.subr.bf16.mxu0 0
    %2472 = vmatpush1.bf16.msra.mxu0 %v1801
    %2473 = vmatprep.subr.bf16.mxu0 0
    %2474 = vmatpush2.bf16.msra.mxu0 %v1816
    %2475 = vmatprep.subr.bf16.mxu0 0
    %2476 = vmatpush2.bf16.msra.mxu0 %v1815
    %2477 = vmatprep.subr.bf16.mxu0 0
    %2478 = vmatpush2.bf16.msra.mxu0 %v1814
    %2479 = vmatprep.subr.bf16.mxu0 0
    %2480 = vmatpush2.bf16.msra.mxu0 %v1813
    %2481 = vmatprep.subr.bf16.mxu0 0
    %2482 = vmatpush2.bf16.msra.mxu0 %v1812
    %2483 = vmatprep.subr.bf16.mxu0 0
    %2484 = vmatpush2.bf16.msra.mxu0 %v1811
    %2485 = vmatprep.subr.bf16.mxu0 0
    %2486 = vmatpush2.bf16.msra.mxu0 %v1810
    %2487 = vmatprep.subr.bf16.mxu0 0
    %2488 = vmatpush2.bf16.msra.mxu0 %v1809
    %2489 = vmatprep.mubr.bf16.mxu0 %v630
    %2490 = vmatmul.mubr.bf16.gmra.mxu0 %v629
    %v2491 = vpop.f32.mrf.mxu0
    %v2492 = vadd.f32 %v2452, %v2491
    %v2493 = vpop.f32.mrf.mxu0
    %v2494 = vpop.f32.mrf.mxu0
    %v2495 = vpop.f32.mrf.mxu0
    %2496 = vdwg.mxu0
    %2497 = vmatprep.subr.bf16.mxu0 0
    %2498 = vmatpush1.bf16.msra.mxu0 %v1824
    %2499 = vmatprep.subr.bf16.mxu0 0
    %2500 = vmatpush1.bf16.msra.mxu0 %v1823
    %2501 = vmatprep.subr.bf16.mxu0 0
    %2502 = vmatpush1.bf16.msra.mxu0 %v1822
    %2503 = vmatprep.subr.bf16.mxu0 0
    %2504 = vmatpush1.bf16.msra.mxu0 %v1821
    %2505 = vmatprep.subr.bf16.mxu0 0
    %2506 = vmatpush1.bf16.msra.mxu0 %v1820
    %2507 = vmatprep.subr.bf16.mxu0 0
    %2508 = vmatpush1.bf16.msra.mxu0 %v1819
    %2509 = vmatprep.subr.bf16.mxu0 0
    %2510 = vmatpush1.bf16.msra.mxu0 %v1818
    %2511 = vmatprep.subr.bf16.mxu0 0
    %2512 = vmatpush1.bf16.msra.mxu0 %v1817
    %2513 = vmatprep.subr.bf16.mxu0 0
    %2514 = vmatpush2.bf16.msra.mxu0 %v1832
    %2515 = vmatprep.subr.bf16.mxu0 0
    %2516 = vmatpush2.bf16.msra.mxu0 %v1831
    %2517 = vmatprep.subr.bf16.mxu0 0
    %2518 = vmatpush2.bf16.msra.mxu0 %v1830
    %2519 = vmatprep.subr.bf16.mxu0 0
    %2520 = vmatpush2.bf16.msra.mxu0 %v1829
    %2521 = vmatprep.subr.bf16.mxu0 0
    %2522 = vmatpush2.bf16.msra.mxu0 %v1828
    %2523 = vmatprep.subr.bf16.mxu0 0
    %2524 = vmatpush2.bf16.msra.mxu0 %v1827
    %2525 = vmatprep.subr.bf16.mxu0 0
    %2526 = vmatpush2.bf16.msra.mxu0 %v1826
    %2527 = vmatprep.subr.bf16.mxu0 0
    %2528 = vmatpush2.bf16.msra.mxu0 %v1825
    %2529 = vmatprep.mubr.bf16.mxu0 %v632
    %2530 = vmatmul.mubr.bf16.gmra.mxu0 %v631
    %v2531 = vpop.f32.mrf.mxu0
    %v2532 = vadd.f32 %v2492, %v2531
    %v2533 = vpop.f32.mrf.mxu0
    %v2534 = vpop.f32.mrf.mxu0
    %v2535 = vpop.f32.mrf.mxu0
    %2536 = vdwg.mxu0
    %2537 = vmatprep.subr.bf16.mxu0 0
    %2538 = vmatpush1.bf16.msra.mxu0 %v1840
    %2539 = vmatprep.subr.bf16.mxu0 0
    %2540 = vmatpush1.bf16.msra.mxu0 %v1839
    %2541 = vmatprep.subr.bf16.mxu0 0
    %2542 = vmatpush1.bf16.msra.mxu0 %v1838
    %2543 = vmatprep.subr.bf16.mxu0 0
    %2544 = vmatpush1.bf16.msra.mxu0 %v1837
    %2545 = vmatprep.subr.bf16.mxu0 0
    %2546 = vmatpush1.bf16.msra.mxu0 %v1836
    %2547 = vmatprep.subr.bf16.mxu0 0
    %2548 = vmatpush1.bf16.msra.mxu0 %v1835
    %2549 = vmatprep.subr.bf16.mxu0 0
    %2550 = vmatpush1.bf16.msra.mxu0 %v1834
    %2551 = vmatprep.subr.bf16.mxu0 0
    %2552 = vmatpush1.bf16.msra.mxu0 %v1833
    %2553 = vmatprep.subr.bf16.mxu0 0
    %2554 = vmatpush2.bf16.msra.mxu0 %v1848
    %2555 = vmatprep.subr.bf16.mxu0 0
    %2556 = vmatpush2.bf16.msra.mxu0 %v1847
    %2557 = vmatprep.subr.bf16.mxu0 0
    %2558 = vmatpush2.bf16.msra.mxu0 %v1846
    %2559 = vmatprep.subr.bf16.mxu0 0
    %2560 = vmatpush2.bf16.msra.mxu0 %v1845
    %2561 = vmatprep.subr.bf16.mxu0 0
    %2562 = vmatpush2.bf16.msra.mxu0 %v1844
    %2563 = vmatprep.subr.bf16.mxu0 0
    %2564 = vmatpush2.bf16.msra.mxu0 %v1843
    %2565 = vmatprep.subr.bf16.mxu0 0
    %2566 = vmatpush2.bf16.msra.mxu0 %v1842
    %2567 = vmatprep.subr.bf16.mxu0 0
    %2568 = vmatpush2.bf16.msra.mxu0 %v1841
    %2569 = vmatprep.mubr.bf16.mxu0 %v634
    %2570 = vmatmul.mubr.bf16.gmra.mxu0 %v633
    %v2571 = vpop.f32.mrf.mxu0
    %v2572 = vadd.f32 %v2532, %v2571
    %v2573 = vpop.f32.mrf.mxu0
    %v2574 = vpop.f32.mrf.mxu0
    %v2575 = vpop.f32.mrf.mxu0
    %2576 = vdwg.mxu0
    %2577 = vmatprep.subr.bf16.mxu0 0
    %2578 = vmatpush1.bf16.msra.mxu0 %v1856
    %2579 = vmatprep.subr.bf16.mxu0 0
    %2580 = vmatpush1.bf16.msra.mxu0 %v1855
    %2581 = vmatprep.subr.bf16.mxu0 0
    %2582 = vmatpush1.bf16.msra.mxu0 %v1854
    %2583 = vmatprep.subr.bf16.mxu0 0
    %2584 = vmatpush1.bf16.msra.mxu0 %v1853
    %2585 = vmatprep.subr.bf16.mxu0 0
    %2586 = vmatpush1.bf16.msra.mxu0 %v1852
    %2587 = vmatprep.subr.bf16.mxu0 0
    %2588 = vmatpush1.bf16.msra.mxu0 %v1851
    %2589 = vmatprep.subr.bf16.mxu0 0
    %2590 = vmatpush1.bf16.msra.mxu0 %v1850
    %2591 = vmatprep.subr.bf16.mxu0 0
    %2592 = vmatpush1.bf16.msra.mxu0 %v1849
    %2593 = vmatprep.subr.bf16.mxu0 0
    %2594 = vmatpush2.bf16.msra.mxu0 %v1864
    %2595 = vmatprep.subr.bf16.mxu0 0
    %2596 = vmatpush2.bf16.msra.mxu0 %v1863
    %2597 = vmatprep.subr.bf16.mxu0 0
    %2598 = vmatpush2.bf16.msra.mxu0 %v1862
    %2599 = vmatprep.subr.bf16.mxu0 0
    %2600 = vmatpush2.bf16.msra.mxu0 %v1861
    %2601 = vmatprep.subr.bf16.mxu0 0
    %2602 = vmatpush2.bf16.msra.mxu0 %v1860
    %2603 = vmatprep.subr.bf16.mxu0 0
    %2604 = vmatpush2.bf16.msra.mxu0 %v1859
    %2605 = vmatprep.subr.bf16.mxu0 0
    %2606 = vmatpush2.bf16.msra.mxu0 %v1858
    %2607 = vmatprep.subr.bf16.mxu0 0
    %2608 = vmatpush2.bf16.msra.mxu0 %v1857
    %2609 = vmatprep.mubr.bf16.mxu0 %v636
    %2610 = vmatmul.mubr.bf16.gmra.mxu0 %v635
    %v2611 = vpop.f32.mrf.mxu0
    %v2612 = vadd.f32 %v2572, %v2611
    %v2613 = vpop.f32.mrf.mxu0
    %v2614 = vpop.f32.mrf.mxu0
    %v2615 = vpop.f32.mrf.mxu0
    %2616 = vdwg.mxu0
    %2617 = vmatprep.subr.bf16.mxu0 0
    %2618 = vmatpush1.bf16.msra.mxu0 %v1872
    %2619 = vmatprep.subr.bf16.mxu0 0
    %2620 = vmatpush1.bf16.msra.mxu0 %v1871
    %2621 = vmatprep.subr.bf16.mxu0 0
    %2622 = vmatpush1.bf16.msra.mxu0 %v1870
    %2623 = vmatprep.subr.bf16.mxu0 0
    %2624 = vmatpush1.bf16.msra.mxu0 %v1869
    %2625 = vmatprep.subr.bf16.mxu0 0
    %2626 = vmatpush1.bf16.msra.mxu0 %v1868
    %2627 = vmatprep.subr.bf16.mxu0 0
    %2628 = vmatpush1.bf16.msra.mxu0 %v1867
    %2629 = vmatprep.subr.bf16.mxu0 0
    %2630 = vmatpush1.bf16.msra.mxu0 %v1866
    %2631 = vmatprep.subr.bf16.mxu0 0
    %2632 = vmatpush1.bf16.msra.mxu0 %v1865
    %2633 = vmatprep.subr.bf16.mxu0 0
    %2634 = vmatpush2.bf16.msra.mxu0 %v1880
    %2635 = vmatprep.subr.bf16.mxu0 0
    %2636 = vmatpush2.bf16.msra.mxu0 %v1879
    %2637 = vmatprep.subr.bf16.mxu0 0
    %2638 = vmatpush2.bf16.msra.mxu0 %v1878
    %2639 = vmatprep.subr.bf16.mxu0 0
    %2640 = vmatpush2.bf16.msra.mxu0 %v1877
    %2641 = vmatprep.subr.bf16.mxu0 0
    %2642 = vmatpush2.bf16.msra.mxu0 %v1876
    %2643 = vmatprep.subr.bf16.mxu0 0
    %2644 = vmatpush2.bf16.msra.mxu0 %v1875
    %2645 = vmatprep.subr.bf16.mxu0 0
    %2646 = vmatpush2.bf16.msra.mxu0 %v1874
    %2647 = vmatprep.subr.bf16.mxu0 0
    %2648 = vmatpush2.bf16.msra.mxu0 %v1873
    %2649 = vmatprep.mubr.bf16.mxu0 %v638
    %2650 = vmatmul.mubr.bf16.gmra.mxu0 %v637
    %v2651 = vpop.f32.mrf.mxu0
    %v2652 = vadd.f32 %v2612, %v2651
    %v2653 = vpop.f32.mrf.mxu0
    %v2654 = vpop.f32.mrf.mxu0
    %v2655 = vpop.f32.mrf.mxu0
    %2656 = vdwg.mxu0
    %2657 = vmatprep.subr.bf16.mxu0 0
    %2658 = vmatpush1.bf16.msra.mxu0 %v1888
    %2659 = vmatprep.subr.bf16.mxu0 0
    %2660 = vmatpush1.bf16.msra.mxu0 %v1887
    %2661 = vmatprep.subr.bf16.mxu0 0
    %2662 = vmatpush1.bf16.msra.mxu0 %v1886
    %2663 = vmatprep.subr.bf16.mxu0 0
    %2664 = vmatpush1.bf16.msra.mxu0 %v1885
    %2665 = vmatprep.subr.bf16.mxu0 0
    %2666 = vmatpush1.bf16.msra.mxu0 %v1884
    %2667 = vmatprep.subr.bf16.mxu0 0
    %2668 = vmatpush1.bf16.msra.mxu0 %v1883
    %2669 = vmatprep.subr.bf16.mxu0 0
    %2670 = vmatpush1.bf16.msra.mxu0 %v1882
    %2671 = vmatprep.subr.bf16.mxu0 0
    %2672 = vmatpush1.bf16.msra.mxu0 %v1881
    %2673 = vmatprep.subr.bf16.mxu0 0
    %2674 = vmatpush2.bf16.msra.mxu0 %v1896
    %2675 = vmatprep.subr.bf16.mxu0 0
    %2676 = vmatpush2.bf16.msra.mxu0 %v1895
    %2677 = vmatprep.subr.bf16.mxu0 0
    %2678 = vmatpush2.bf16.msra.mxu0 %v1894
    %2679 = vmatprep.subr.bf16.mxu0 0
    %2680 = vmatpush2.bf16.msra.mxu0 %v1893
    %2681 = vmatprep.subr.bf16.mxu0 0
    %2682 = vmatpush2.bf16.msra.mxu0 %v1892
    %2683 = vmatprep.subr.bf16.mxu0 0
    %2684 = vmatpush2.bf16.msra.mxu0 %v1891
    %2685 = vmatprep.subr.bf16.mxu0 0
    %2686 = vmatpush2.bf16.msra.mxu0 %v1890
    %2687 = vmatprep.subr.bf16.mxu0 0
    %2688 = vmatpush2.bf16.msra.mxu0 %v1889
    %2689 = vmatprep.mubr.bf16.mxu0 %v640
    %2690 = vmatmul.mubr.bf16.gmra.mxu0 %v639
    %v2691 = vpop.f32.mrf.mxu0
    %v2692 = vadd.f32 %v2652, %v2691
    %v2693 = vpop.f32.mrf.mxu0
    %v2694 = vpop.f32.mrf.mxu0
    %v2695 = vpop.f32.mrf.mxu0
    %2696 = vdwg.mxu0
    %2697 = vmatprep.subr.bf16.mxu0 0
    %2698 = vmatpush1.bf16.msra.mxu0 %v1904
    %2699 = vmatprep.subr.bf16.mxu0 0
    %2700 = vmatpush1.bf16.msra.mxu0 %v1903
    %2701 = vmatprep.subr.bf16.mxu0 0
    %2702 = vmatpush1.bf16.msra.mxu0 %v1902
    %2703 = vmatprep.subr.bf16.mxu0 0
    %2704 = vmatpush1.bf16.msra.mxu0 %v1901
    %2705 = vmatprep.subr.bf16.mxu0 0
    %2706 = vmatpush1.bf16.msra.mxu0 %v1900
    %2707 = vmatprep.subr.bf16.mxu0 0
    %2708 = vmatpush1.bf16.msra.mxu0 %v1899
    %2709 = vmatprep.subr.bf16.mxu0 0
    %2710 = vmatpush1.bf16.msra.mxu0 %v1898
    %2711 = vmatprep.subr.bf16.mxu0 0
    %2712 = vmatpush1.bf16.msra.mxu0 %v1897
    %2713 = vmatprep.subr.bf16.mxu0 0
    %2714 = vmatpush2.bf16.msra.mxu0 %v1912
    %2715 = vmatprep.subr.bf16.mxu0 0
    %2716 = vmatpush2.bf16.msra.mxu0 %v1911
    %2717 = vmatprep.subr.bf16.mxu0 0
    %2718 = vmatpush2.bf16.msra.mxu0 %v1910
    %2719 = vmatprep.subr.bf16.mxu0 0
    %2720 = vmatpush2.bf16.msra.mxu0 %v1909
    %2721 = vmatprep.subr.bf16.mxu0 0
    %2722 = vmatpush2.bf16.msra.mxu0 %v1908
    %2723 = vmatprep.subr.bf16.mxu0 0
    %2724 = vmatpush2.bf16.msra.mxu0 %v1907
    %2725 = vmatprep.subr.bf16.mxu0 0
    %2726 = vmatpush2.bf16.msra.mxu0 %v1906
    %2727 = vmatprep.subr.bf16.mxu0 0
    %2728 = vmatpush2.bf16.msra.mxu0 %v1905
    %2729 = vmatprep.mubr.bf16.mxu0 %v642
    %2730 = vmatmul.mubr.bf16.gmra.mxu0 %v641
    %v2731 = vpop.f32.mrf.mxu0
    %v2732 = vadd.f32 %v2692, %v2731
    %v2733 = vpop.f32.mrf.mxu0
    %v2734 = vpop.f32.mrf.mxu0
    %v2735 = vpop.f32.mrf.mxu0
    %2736 = vdwg.mxu0
    %2737 = vmatprep.subr.bf16.mxu0 0
    %2738 = vmatpush1.bf16.msra.mxu0 %v1920
    %2739 = vmatprep.subr.bf16.mxu0 0
    %2740 = vmatpush1.bf16.msra.mxu0 %v1919
    %2741 = vmatprep.subr.bf16.mxu0 0
    %2742 = vmatpush1.bf16.msra.mxu0 %v1918
    %2743 = vmatprep.subr.bf16.mxu0 0
    %2744 = vmatpush1.bf16.msra.mxu0 %v1917
    %2745 = vmatprep.subr.bf16.mxu0 0
    %2746 = vmatpush1.bf16.msra.mxu0 %v1916
    %2747 = vmatprep.subr.bf16.mxu0 0
    %2748 = vmatpush1.bf16.msra.mxu0 %v1915
    %2749 = vmatprep.subr.bf16.mxu0 0
    %2750 = vmatpush1.bf16.msra.mxu0 %v1914
    %2751 = vmatprep.subr.bf16.mxu0 0
    %2752 = vmatpush1.bf16.msra.mxu0 %v1913
    %2753 = vmatprep.subr.bf16.mxu0 0
    %2754 = vmatpush2.bf16.msra.mxu0 %v1928
    %2755 = vmatprep.subr.bf16.mxu0 0
    %2756 = vmatpush2.bf16.msra.mxu0 %v1927
    %2757 = vmatprep.subr.bf16.mxu0 0
    %2758 = vmatpush2.bf16.msra.mxu0 %v1926
    %2759 = vmatprep.subr.bf16.mxu0 0
    %2760 = vmatpush2.bf16.msra.mxu0 %v1925
    %2761 = vmatprep.subr.bf16.mxu0 0
    %2762 = vmatpush2.bf16.msra.mxu0 %v1924
    %2763 = vmatprep.subr.bf16.mxu0 0
    %2764 = vmatpush2.bf16.msra.mxu0 %v1923
    %2765 = vmatprep.subr.bf16.mxu0 0
    %2766 = vmatpush2.bf16.msra.mxu0 %v1922
    %2767 = vmatprep.subr.bf16.mxu0 0
    %2768 = vmatpush2.bf16.msra.mxu0 %v1921
    %2769 = vmatprep.mubr.bf16.mxu0 %v644
    %2770 = vmatmul.mubr.bf16.gmra.mxu0 %v643
    %v2771 = vpop.f32.mrf.mxu0
    %v2772 = vadd.f32 %v2732, %v2771
    %v2773 = vpop.f32.mrf.mxu0
    %v2774 = vpop.f32.mrf.mxu0
    %v2775 = vpop.f32.mrf.mxu0
    %2776 = vdwg.mxu0
    %2777 = vmatprep.subr.bf16.mxu0 0
    %2778 = vmatpush1.bf16.msra.mxu0 %v1936
    %2779 = vmatprep.subr.bf16.mxu0 0
    %2780 = vmatpush1.bf16.msra.mxu0 %v1935
    %2781 = vmatprep.subr.bf16.mxu0 0
    %2782 = vmatpush1.bf16.msra.mxu0 %v1934
    %2783 = vmatprep.subr.bf16.mxu0 0
    %2784 = vmatpush1.bf16.msra.mxu0 %v1933
    %2785 = vmatprep.subr.bf16.mxu0 0
    %2786 = vmatpush1.bf16.msra.mxu0 %v1932
    %2787 = vmatprep.subr.bf16.mxu0 0
    %2788 = vmatpush1.bf16.msra.mxu0 %v1931
    %2789 = vmatprep.subr.bf16.mxu0 0
    %2790 = vmatpush1.bf16.msra.mxu0 %v1930
    %2791 = vmatprep.subr.bf16.mxu0 0
    %2792 = vmatpush1.bf16.msra.mxu0 %v1929
    %2793 = vmatprep.subr.bf16.mxu0 0
    %2794 = vmatpush2.bf16.msra.mxu0 %v1944
    %2795 = vmatprep.subr.bf16.mxu0 0
    %2796 = vmatpush2.bf16.msra.mxu0 %v1943
    %2797 = vmatprep.subr.bf16.mxu0 0
    %2798 = vmatpush2.bf16.msra.mxu0 %v1942
    %2799 = vmatprep.subr.bf16.mxu0 0
    %2800 = vmatpush2.bf16.msra.mxu0 %v1941
    %2801 = vmatprep.subr.bf16.mxu0 0
    %2802 = vmatpush2.bf16.msra.mxu0 %v1940
    %2803 = vmatprep.subr.bf16.mxu0 0
    %2804 = vmatpush2.bf16.msra.mxu0 %v1939
    %2805 = vmatprep.subr.bf16.mxu0 0
    %2806 = vmatpush2.bf16.msra.mxu0 %v1938
    %2807 = vmatprep.subr.bf16.mxu0 0
    %2808 = vmatpush2.bf16.msra.mxu0 %v1937
    %2809 = vmatprep.mubr.bf16.mxu0 %v646
    %2810 = vmatmul.mubr.bf16.gmra.mxu0 %v645
    %v2811 = vpop.f32.mrf.mxu0
    %v2812 = vadd.f32 %v2772, %v2811
    %v2813 = vpop.f32.mrf.mxu0
    %v2814 = vpop.f32.mrf.mxu0
    %v2815 = vpop.f32.mrf.mxu0
    %2816 = vdwg.mxu0
    %2817 = vmatprep.subr.bf16.mxu0 0
    %2818 = vmatpush1.bf16.msra.mxu0 %v1952
    %2819 = vmatprep.subr.bf16.mxu0 0
    %2820 = vmatpush1.bf16.msra.mxu0 %v1951
    %2821 = vmatprep.subr.bf16.mxu0 0
    %2822 = vmatpush1.bf16.msra.mxu0 %v1950
    %2823 = vmatprep.subr.bf16.mxu0 0
    %2824 = vmatpush1.bf16.msra.mxu0 %v1949
    %2825 = vmatprep.subr.bf16.mxu0 0
    %2826 = vmatpush1.bf16.msra.mxu0 %v1948
    %2827 = vmatprep.subr.bf16.mxu0 0
    %2828 = vmatpush1.bf16.msra.mxu0 %v1947
    %2829 = vmatprep.subr.bf16.mxu0 0
    %2830 = vmatpush1.bf16.msra.mxu0 %v1946
    %2831 = vmatprep.subr.bf16.mxu0 0
    %2832 = vmatpush1.bf16.msra.mxu0 %v1945
    %2833 = vmatprep.subr.bf16.mxu0 0
    %2834 = vmatpush2.bf16.msra.mxu0 %v1960
    %2835 = vmatprep.subr.bf16.mxu0 0
    %2836 = vmatpush2.bf16.msra.mxu0 %v1959
    %2837 = vmatprep.subr.bf16.mxu0 0
    %2838 = vmatpush2.bf16.msra.mxu0 %v1958
    %2839 = vmatprep.subr.bf16.mxu0 0
    %2840 = vmatpush2.bf16.msra.mxu0 %v1957
    %2841 = vmatprep.subr.bf16.mxu0 0
    %2842 = vmatpush2.bf16.msra.mxu0 %v1956
    %2843 = vmatprep.subr.bf16.mxu0 0
    %2844 = vmatpush2.bf16.msra.mxu0 %v1955
    %2845 = vmatprep.subr.bf16.mxu0 0
    %2846 = vmatpush2.bf16.msra.mxu0 %v1954
    %2847 = vmatprep.subr.bf16.mxu0 0
    %2848 = vmatpush2.bf16.msra.mxu0 %v1953
    %2849 = vmatprep.mubr.bf16.mxu0 %v648
    %2850 = vmatmul.mubr.bf16.gmra.mxu0 %v647
    %v2851 = vpop.f32.mrf.mxu0
    %v2852 = vadd.f32 %v2812, %v2851
    %v2853 = vpop.f32.mrf.mxu0
    %v2854 = vpop.f32.mrf.mxu0
    %v2855 = vpop.f32.mrf.mxu0
    %2856 = vdwg.mxu0
    %v2857 = vmax.f32 %v2852, 0.0
    %v2858 = vpack.c.bf16 %v2857, %v2857
    %v2859 = vld [vmem:[%s2] sm:$0xf]
    %v2860 = vld [vmem:[%s2 + $0x4] sm:$0xf]
    %v2861 = vld [vmem:[%s2 + $0x8] sm:$0xf]
    %v2862 = vld [vmem:[%s2 + $0xc] sm:$0xf]
    %v2863 = vld [vmem:[%s2 + $0x10] sm:$0xf]
    %v2864 = vld [vmem:[%s2 + $0x14] sm:$0xf]
    %v2865 = vld [vmem:[%s2 + $0x18] sm:$0xf]
    %v2866 = vld [vmem:[%s2 + $0x1c] sm:$0xf]
    %v2867 = vld [vmem:[%s2 + $0x20] sm:$0xf]
    %v2868 = vld [vmem:[%s2 + $0x24] sm:$0xf]
    %v2869 = vld [vmem:[%s2 + $0x28] sm:$0xf]
    %v2870 = vld [vmem:[%s2 + $0x2c] sm:$0xf]
    %v2871 = vld [vmem:[%s2 + $0x30] sm:$0xf]
    %v2872 = vld [vmem:[%s2 + $0x34] sm:$0xf]
    %v2873 = vld [vmem:[%s2 + $0x38] sm:$0xf]
    %v2874 = vld [vmem:[%s2 + $0x3c] sm:$0xf]
    %v2875 = vld [vmem:[%s4 + $0x1] sm:$0x1]
    %v2876 = vlaneseq
    %v2877 = vshrl.u32 %v2876, 7
    %v2878 = vsub.s32 0, %v2877
    %v2879 = vrot.slane %v2875, %v2878
    %v2896 = vunpack.c.l.b16 %v2859
    %v2897 = vunpack.c.l.b16 %v2860
    %v2898 = vunpack.c.l.b16 %v2861
    %v2899 = vunpack.c.l.b16 %v2862
    %v2900 = vunpack.c.l.b16 %v2863
    %v2901 = vunpack.c.l.b16 %v2864
    %v2902 = vunpack.c.l.b16 %v2865
    %v2903 = vunpack.c.l.b16 %v2866
    %v2904 = vunpack.c.l.b16 %v2867
    %v2905 = vunpack.c.l.b16 %v2868
    %v2906 = vunpack.c.l.b16 %v2869
    %v2907 = vunpack.c.l.b16 %v2870
    %v2908 = vunpack.c.l.b16 %v2871
    %v2909 = vunpack.c.l.b16 %v2872
    %v2910 = vunpack.c.l.b16 %v2873
    %v2911 = vunpack.c.l.b16 %v2874
    %v2912 = vpack.c.b16 %v2897, %v2896
    %v2913 = vpack.c.b16 %v2899, %v2898
    %v2914 = vpack.c.b16 %v2901, %v2900
    %v2915 = vpack.c.b16 %v2903, %v2902
    %v2916 = vpack.c.b16 %v2905, %v2904
    %v2917 = vpack.c.b16 %v2907, %v2906
    %v2918 = vpack.c.b16 %v2909, %v2908
    %v2919 = vpack.c.b16 %v2911, %v2910
    %2928 = vmatprep.subr.bf16.mxu0 0
    %2929 = vmatpush1.bf16.msra.mxu0 %v2919
    %2930 = vmatprep.subr.bf16.mxu0 0
    %2931 = vmatpush1.bf16.msra.mxu0 %v2918
    %2932 = vmatprep.subr.bf16.mxu0 0
    %2933 = vmatpush1.bf16.msra.mxu0 %v2917
    %2934 = vmatprep.subr.bf16.mxu0 0
    %2935 = vmatpush1.bf16.msra.mxu0 %v2916
    %2936 = vmatprep.subr.bf16.mxu0 0
    %2937 = vmatpush1.bf16.msra.mxu0 %v2915
    %2938 = vmatprep.subr.bf16.mxu0 0
    %2939 = vmatpush1.bf16.msra.mxu0 %v2914
    %2940 = vmatprep.subr.bf16.mxu0 0
    %2941 = vmatpush1.bf16.msra.mxu0 %v2913
    %2942 = vmatprep.subr.bf16.mxu0 0
    %2943 = vmatpush1.bf16.msra.mxu0 %v2912
    %2944 = vmatprep.subr.bf16.mxu0 0
    %2945 = vmatpush2.bf16.msra.mxu0 0
    %2946 = vmatprep.subr.bf16.mxu0 0
    %2947 = vmatpush2.bf16.msra.mxu0 0
    %2948 = vmatprep.subr.bf16.mxu0 0
    %2949 = vmatpush2.bf16.msra.mxu0 0
    %2950 = vmatprep.subr.bf16.mxu0 0
    %2951 = vmatpush2.bf16.msra.mxu0 0
    %2952 = vmatprep.subr.bf16.mxu0 0
    %2953 = vmatpush2.bf16.msra.mxu0 0
    %2954 = vmatprep.subr.bf16.mxu0 0
    %2955 = vmatpush2.bf16.msra.mxu0 0
    %2956 = vmatprep.subr.bf16.mxu0 0
    %2957 = vmatpush2.bf16.msra.mxu0 0
    %2958 = vmatprep.subr.bf16.mxu0 0
    %2959 = vmatpush2.bf16.msra.mxu0 0
    %2960 = vmatprep.mubr.bf16.mxu0 0
    %2961 = vmatmul.mubr.bf16.gmra.mxu0 %v2858
    %v2962 = vpop.f32.mrf.mxu0
    %v2963 = vadd.f32 %v2879, %v2962
    %v2964 = vpop.f32.mrf.mxu0
    %v2965 = vpop.f32.mrf.mxu0
    %v2966 = vpop.f32.mrf.mxu0
    %2967 = vdwg.mxu0
    %v2968 = vmax.f32 %v2963, 0.0
    %v2969 = vpack.c.bf16 %v2968, %v2968
    %v2970 = vld [vmem:[%s3] sm:$0xf]
    %v2971 = vld [vmem:[%s3 + $0x4] sm:$0xf]
    %v2972 = vld [vmem:[%s3 + $0x8] sm:$0xf]
    %v2973 = vld [vmem:[%s3 + $0xc] sm:$0xf]
    %v2974 = vld [vmem:[%s3 + $0x10] sm:$0xf]
    %v2975 = vld [vmem:[%s3 + $0x14] sm:$0xf]
    %v2976 = vld [vmem:[%s3 + $0x18] sm:$0xf]
    %v2977 = vld [vmem:[%s3 + $0x1c] sm:$0xf]
    %v2978 = vld [vmem:[%s3 + $0x20] sm:$0xf]
    %v2979 = vld [vmem:[%s3 + $0x24] sm:$0xf]
    %v2980 = vld [vmem:[%s3 + $0x28] sm:$0xf]
    %v2981 = vld [vmem:[%s3 + $0x2c] sm:$0xf]
    %v2982 = vld [vmem:[%s3 + $0x30] sm:$0xf]
    %v2983 = vld [vmem:[%s3 + $0x34] sm:$0xf]
    %v2984 = vld [vmem:[%s3 + $0x38] sm:$0xf]
    %v2985 = vld [vmem:[%s3 + $0x3c] sm:$0xf]
    %v2986 = vld [vmem:[%s4 + $0x2] sm:$0x1]
    %v2987 = vlaneseq
    %v2988 = vshrl.u32 %v2987, 7
    %v2989 = vsub.s32 0, %v2988
    %v2990 = vrot.slane %v2986, %v2989
    %v3007 = vunpack.c.l.b16 %v2970
    %v3008 = vunpack.c.l.b16 %v2971
    %v3009 = vunpack.c.l.b16 %v2972
    %v3010 = vunpack.c.l.b16 %v2973
    %v3011 = vunpack.c.l.b16 %v2974
    %v3012 = vunpack.c.l.b16 %v2975
    %v3013 = vunpack.c.l.b16 %v2976
    %v3014 = vunpack.c.l.b16 %v2977
    %v3015 = vunpack.c.l.b16 %v2978
    %v3016 = vunpack.c.l.b16 %v2979
    %v3017 = vunpack.c.l.b16 %v2980
    %v3018 = vunpack.c.l.b16 %v2981
    %v3019 = vunpack.c.l.b16 %v2982
    %v3020 = vunpack.c.l.b16 %v2983
    %v3021 = vunpack.c.l.b16 %v2984
    %v3022 = vunpack.c.l.b16 %v2985
    %v3023 = vpack.c.b16 %v3008, %v3007
    %v3024 = vpack.c.b16 %v3010, %v3009
    %v3025 = vpack.c.b16 %v3012, %v3011
    %v3026 = vpack.c.b16 %v3014, %v3013
    %v3027 = vpack.c.b16 %v3016, %v3015
    %v3028 = vpack.c.b16 %v3018, %v3017
    %v3029 = vpack.c.b16 %v3020, %v3019
    %v3030 = vpack.c.b16 %v3022, %v3021
    %3039 = vmatprep.subr.bf16.mxu0 0
    %3040 = vmatpush1.bf16.msra.mxu0 %v3030
    %3041 = vmatprep.subr.bf16.mxu0 0
    %3042 = vmatpush1.bf16.msra.mxu0 %v3029
    %3043 = vmatprep.subr.bf16.mxu0 0
    %3044 = vmatpush1.bf16.msra.mxu0 %v3028
    %3045 = vmatprep.subr.bf16.mxu0 0
    %3046 = vmatpush1.bf16.msra.mxu0 %v3027
    %3047 = vmatprep.subr.bf16.mxu0 0
    %3048 = vmatpush1.bf16.msra.mxu0 %v3026
    %3049 = vmatprep.subr.bf16.mxu0 0
    %3050 = vmatpush1.bf16.msra.mxu0 %v3025
    %3051 = vmatprep.subr.bf16.mxu0 0
    %3052 = vmatpush1.bf16.msra.mxu0 %v3024
    %3053 = vmatprep.subr.bf16.mxu0 0
    %3054 = vmatpush1.bf16.msra.mxu0 %v3023
    %3055 = vmatprep.subr.bf16.mxu0 0
    %3056 = vmatpush2.bf16.msra.mxu0 0
    %3057 = vmatprep.subr.bf16.mxu0 0
    %3058 = vmatpush2.bf16.msra.mxu0 0
    %3059 = vmatprep.subr.bf16.mxu0 0
    %3060 = vmatpush2.bf16.msra.mxu0 0
    %3061 = vmatprep.subr.bf16.mxu0 0
    %3062 = vmatpush2.bf16.msra.mxu0 0
    %3063 = vmatprep.subr.bf16.mxu0 0
    %3064 = vmatpush2.bf16.msra.mxu0 0
    %3065 = vmatprep.subr.bf16.mxu0 0
    %3066 = vmatpush2.bf16.msra.mxu0 0
    %3067 = vmatprep.subr.bf16.mxu0 0
    %3068 = vmatpush2.bf16.msra.mxu0 0
    %3069 = vmatprep.subr.bf16.mxu0 0
    %3070 = vmatpush2.bf16.msra.mxu0 0
    %3071 = vmatprep.mubr.bf16.mxu0 0
    %3072 = vmatmul.mubr.bf16.gmra.mxu0 %v2969
    %v3073 = vpop.f32.mrf.mxu0
    %v3074 = vadd.f32 %v2990, %v3073
    %v3075 = vpop.f32.mrf.mxu0
    %v3076 = vpop.f32.mrf.mxu0
    %v3077 = vpop.f32.mrf.mxu0
    %3078 = vdwg.mxu0
    %v3079 = vxor.u32 %v3074, 2147483648
    %v3080 = vmul.f32 %v3079, 1.442695
    %v3081 = vpow.pop %v3080
    %v3082 = vadd.f32 %v3081, 1.0
    %v3083 = vrcp.pop %v3082
    %v3084 = vmul.f32 1.0, %v3083
    %3085 = vst [vmem:[#allocation5] sm:$0xff] %v3084
    // Predicated region
    $region26: #{_mlp_forward.1} parent=1 // pred_check
      _
    $region27: #{_mlp_forward.1} parent=1 // pred_check_branch
      %3087 = sbr.rel (0) target = $region29
    $region28: #{_mlp_forward.1} parent=1 // pred_region
      %s3089 = ssub.s32 128, 128
      %3090 = vsyncadd [#allocation4], %s3089
      %s3092 = sshll.u32 [#allocation5], 4
      %s3093 = int_to_ptr.vmem [resolvable:$true] %s3092
      %3095 = dma.vmem_to_hbm [thread:$0]  %s3093, 128, %s5, [#allocation4]
    $region29: #{_mlp_forward.1} parent=1 // pred_fallthru
      _
    // Predicated region
    $region30: #{_mlp_forward.1} parent=1 // pred_check
      _
    $region31: #{_mlp_forward.1} parent=1 // pred_check_branch
      %3097 = sbr.rel (0) target = $region33
    $region32: #{_mlp_forward.1} parent=1 // pred_region
      %3098 = dma.done [#allocation4], 128
    $region33: #{_mlp_forward.1} parent=1 // pred_fallthru
      _
    %3099 = vsyncpa [#allocation3], 1
    %3100 = vsyncpa [#allocation4], 1

</llo_original>
